<compile_context>
chip_gen: v6e
topology: v6e:2x2x1
jax: 0.10.0
libtpu: 0.0.40
codegen_flags: <defaults>
</compile_context>

<pallas_src>
import functools

import jax
import jax.numpy as jnp
from jax.experimental import pallas as pl
from jax.experimental.pallas import tpu as pltpu

LANE = 128
SUBLANE = 8


def _round_up(n, m):
    return ((n + m - 1) // m) * m


def _pad_to(x, shape):
    return jnp.pad(x, [(0, s - d) for d, s in zip(x.shape, shape)])


# ----------------------------- Pallas kernel --------------------------------
def graph_encoder_kernel(
    a_ref,      # (Np, Np) bf16  normalized adjacency (A+I, sym-normalized), zero-padded
    p_ref,      # (Bp, Np) bf16  mean-pool matrix, zero-padded
    x_ref,      # (Np, D)  bf16  node features, lane-padded
    w_ref,      # (6, D, D) bf16 packed weights [W1,W2,W3,Wm1,Wm2,Wm3] (VMEM-resident)
    b_ref,      # (8, D)   f32   packed biases  [b1,b2,b3,bm1,bm2,bm3,gamma,beta]
    temp_ref,   # (1, 1)   f32   SMEM scalar temperature
    out_ref,    # (Bp, D)  f32   lane-dense output (real cols = nout)
    *,
    nout: int,
):
    f32 = jnp.float32
    bf16 = jnp.bfloat16

    a = a_ref[...]                                            # bf16 (Np, Np)

    # --- GCN layer 1, reassociated: (A @ X) @ W1 + b1, ReLU (contract narrow F first)
    ax = jnp.dot(a, x_ref[...], preferred_element_type=f32)   # (Np, D) f32
    h = jnp.dot(ax.astype(bf16), w_ref[0], preferred_element_type=f32) + b_ref[0:1]
    h = jnp.maximum(h, 0.0)

    # --- GCN layer 2: A @ (H @ W2) + b2, ReLU ---
    h = jnp.dot(h.astype(bf16), w_ref[1], preferred_element_type=f32)
    h = jnp.dot(a, h.astype(bf16), preferred_element_type=f32) + b_ref[1:2]
    h = jnp.maximum(h, 0.0)

    # --- GCN layer 3 (no ReLU, matches the reference forward) ---
    h = jnp.dot(h.astype(bf16), w_ref[2], preferred_element_type=f32)
    h = jnp.dot(a, h.astype(bf16), preferred_element_type=f32) + b_ref[2:3]

    # --- global mean pool: (Bp, Np) @ (Np, D) -> (Bp, D) ---
    g = jnp.dot(p_ref[...], h.astype(bf16), preferred_element_type=f32)

    # --- MLP head ---
    g = jnp.maximum(
        jnp.dot(g.astype(bf16), w_ref[3], preferred_element_type=f32) + b_ref[3:4], 0.0)
    g = jnp.maximum(
        jnp.dot(g.astype(bf16), w_ref[4], preferred_element_type=f32) + b_ref[4:5], 0.0)
    g = jnp.dot(g.astype(bf16), w_ref[5], preferred_element_type=f32) + b_ref[5:6]

    # --- LayerNorm over the real `nout` lanes (explicit mask, padding-robust) ---
    inv_n = 1.0 / float(nout)
    lane = jax.lax.broadcasted_iota(jnp.int32, g.shape, 1)
    mask = (lane < nout).astype(f32)
    g = g * mask
    mu = jnp.sum(g, axis=-1, keepdims=True) * inv_n
    diff = (g - mu) * mask
    var = jnp.sum(diff * diff, axis=-1, keepdims=True) * inv_n
    xhat = diff * jax.lax.rsqrt(var + 1e-5)
    y = xhat * b_ref[6:7] + b_ref[7:8]                         # gamma / beta rows

    # --- temperature scale (scalar exp once, from SMEM) ---
    out_ref[...] = y * jnp.exp(temp_ref[0, 0])


# ------------------------- generation-aware VMEM limit ------------------------
def _vmem_limit_bytes():
    cap = 128 * 1024 * 1024
    try:
        cap = int(pltpu.get_tpu_info().vmem_capacity_bytes)
    except Exception:
        pass
    # leave headroom: ~48 MiB on v7x (64 MiB physical), up to 96 MiB on v5e/v6e.
    return int(min(cap * 3 // 4, 96 * 1024 * 1024))


# -------------------------------- jitted launcher -----------------------------
@functools.partial(jax.jit, static_argnames=("nout", "b_real"))
def graph_encoder_pallas_batched(a_slab, p_slab, x_slab, w_slab, b_slab, temp,
                                 *, nout, b_real):
    NB, Np, _ = a_slab.shape
    Bp = p_slab.shape[1]
    D = x_slab.shape[-1]

    out = pl.pallas_call(
        functools.partial(graph_encoder_kernel, nout=nout),
        out_shape=jax.ShapeDtypeStruct((NB, Bp, D), jnp.float32),
        grid=(NB,),
        in_specs=[
            pl.BlockSpec((None, Np, Np), lambda i: (i, 0, 0)),   # per-batch adjacency
            pl.BlockSpec((None, Bp, Np), lambda i: (i, 0, 0)),   # per-batch pooling
            pl.BlockSpec((None, Np, D), lambda i: (i, 0, 0)),    # per-batch features
            pl.BlockSpec((6, D, D), lambda i: (0, 0, 0)),        # weights: VMEM-resident
            pl.BlockSpec((8, D), lambda i: (0, 0)),              # biases:  VMEM-resident
            pl.BlockSpec(memory_space=pltpu.MemorySpace.SMEM),   # temp scalar
        ],
        out_specs=pl.BlockSpec((None, Bp, D), lambda i: (i, 0, 0)),
        compiler_params=pltpu.CompilerParams(
            dimension_semantics=("parallel",),
            vmem_limit_bytes=_vmem_limit_bytes(),
        ),
    )(a_slab, p_slab, x_slab, w_slab, b_slab, temp)
    return out[:, :b_real, :nout]


# --------------------------- one-time host-side packing -----------------------
def pack_graph_encoder_params(params):
    """Pack 15 tiny parameter tensors into two padded slabs (done once, off the hot path)."""
    F = params["w1"].shape[0]
    GH = params["w1"].shape[1]
    NH = params["wm1"].shape[1]
    NOUT = params["wm3"].shape[1]
    D = _round_up(max(F, GH, NH, NOUT), LANE)

    def padw(w):
        return _pad_to(w, (D, D))

    w_slab = jnp.stack(
        [padw(params["w1"]), padw(params["w2"]), padw(params["w3"]),
         padw(params["wm1"]), padw(params["wm2"]), padw(params["wm3"])]
    ).astype(jnp.bfloat16)                                    # (6, D, D) bf16

    def padb(b):
        return _pad_to(b, (1, D))

    b_slab = jnp.concatenate(
        [padb(params["b1"]), padb(params["b2"]), padb(params["b3"]),
         padb(params["bm1"]), padb(params["bm2"]), padb(params["bm3"]),
         padb(params["gamma"]), padb(params["beta"])], axis=0
    ).astype(jnp.float32)                                     # (8, D) f32

    temp = params["temp"].astype(jnp.float32).reshape(1, 1)
    return {"w_slab": w_slab, "b_slab": b_slab, "temp": temp, "D": D, "nout": NOUT}


def prepare_graph_batches(a_hats, pools, xs, D):
    """Pad + bf16-cast a stack of mini-batch operands (done once per data batch)."""
    NB, N, _ = a_hats.shape
    B = pools.shape[1]
    Np = _round_up(max(N, LANE), LANE)         # lane-dense adjacency / contraction dim
    Bp = max(_round_up(B, SUBLANE), SUBLANE)   # sublane-aligned graph dim
    a_slab = _pad_to(a_hats, (NB, Np, Np)).astype(jnp.bfloat16)
    p_slab = _pad_to(pools, (NB, Bp, Np)).astype(jnp.bfloat16)
    x_slab = _pad_to(xs, (NB, Np, D)).astype(jnp.bfloat16)
    return a_slab, p_slab, x_slab


# ------------------------------ JAX glue -------------------------------------
def build_normalized_adjacency(edge_index, num_nodes):
    """A_hat = D^-1/2 (A + I) D^-1/2, matching PyG GCNConv defaults."""
    src, dst = edge_index[0], edge_index[1]
    a = jnp.zeros((num_nodes, num_nodes), jnp.float32)
    a = a.at[dst, src].set(1.0)                       # message flows src -> dst
    a = a + jnp.eye(num_nodes, dtype=jnp.float32)     # self loops
    deg = jnp.sum(a, axis=1)
    dinv = jnp.where(deg > 0, 1.0 / jnp.sqrt(deg), 0.0)
    return dinv[:, None] * a * dinv[None, :]


def build_mean_pool_matrix(batch, num_graphs):
    onehot = (batch[None, :] == jnp.arange(num_graphs)[:, None]).astype(jnp.float32)
    counts = jnp.maximum(jnp.sum(onehot, axis=1, keepdims=True), 1.0)
    return onehot / counts


def init_params(key, num_node_features, nout, nhid, graph_hidden_channels):
    ks = jax.random.split(key, 12)

    def w(k, shape):
        return (jax.random.normal(k, shape, jnp.float32) * 0.1).astype(jnp.float32)

    GH = graph_hidden_channels
    return {
        "w1": w(ks[0], (num_node_features, GH)), "b1": w(ks[1], (1, GH)),
        "w2": w(ks[2], (GH, GH)),                "b2": w(ks[3], (1, GH)),
        "w3": w(ks[4], (GH, GH)),                "b3": w(ks[5], (1, GH)),
        "wm1": w(ks[6], (GH, nhid)),             "bm1": w(ks[7], (1, nhid)),
        "wm2": w(ks[8], (nhid, nhid)),           "bm2": w(ks[9], (1, nhid)),
        "wm3": w(ks[10], (nhid, nout)),          "bm3": w(ks[11], (1, nout)),
        "gamma": jnp.ones((1, nout), jnp.float32),
        "beta": jnp.zeros((1, nout), jnp.float32),
        "temp": jnp.full((1, 1), 0.07, jnp.float32),
    }


def graph_encoder_reference_f32(a_hat, pool, x, p):
    """Pure-f32 reference matching the PyTorch forward (loose tolerance)."""
    h = jnp.maximum(a_hat @ (x @ p["w1"]) + p["b1"], 0.0)
    h = jnp.maximum(a_hat @ (h @ p["w2"]) + p["b2"], 0.0)
    h = a_hat @ (h @ p["w3"]) + p["b3"]
    g = pool @ h
    g = jnp.maximum(g @ p["wm1"] + p["bm1"], 0.0)
    g = jnp.maximum(g @ p["wm2"] + p["bm2"], 0.0)
    g = g @ p["wm3"] + p["bm3"]
    mu = jnp.mean(g, axis=-1, keepdims=True)
    var = jnp.mean((g - mu) ** 2, axis=-1, keepdims=True)
    y = (g - mu) / jnp.sqrt(var + 1e-5) * p["gamma"] + p["beta"]
    return y * jnp.exp(p["temp"][0, 0])


def graph_encoder_reference_bf16(a_hat, pool, x, p):
    """Reference mimicking the kernel's bf16-in / f32-accumulate matmuls."""
    bf16, f32 = jnp.bfloat16, jnp.float32

    def mm(a, b):
        return jnp.dot(a.astype(bf16), b.astype(bf16), preferred_element_type=f32)

    h = jnp.maximum(mm(mm(a_hat, x), p["w1"]) + p["b1"], 0.0)   # reassociated layer 1
    h = jnp.maximum(mm(a_hat, mm(h, p["w2"])) + p["b2"], 0.0)
    h = mm(a_hat, mm(h, p["w3"])) + p["b3"]
    g = mm(pool, h)
    g = jnp.maximum(mm(g, p["wm1"]) + p["bm1"], 0.0)
    g = jnp.maximum(mm(g, p["wm2"]) + p["bm2"], 0.0)
    g = mm(g, p["wm3"]) + p["bm3"]
    mu = jnp.mean(g, axis=-1, keepdims=True)
    var = jnp.mean((g - mu) ** 2, axis=-1, keepdims=True)
    y = (g - mu) * jax.lax.rsqrt(var + 1e-5) * p["gamma"] + p["beta"]
    return y * jnp.exp(p["temp"][0, 0])


# ------------------------------- main -----------------------------------------
if __name__ == "__main__":
    NUM_NODE_FEATURES = 8
    GRAPH_HIDDEN = 32
    NHID = 32
    NOUT = 16
    N_NODES = 16      # per mini-batch: 2 graphs of 8 nodes each
    N_GRAPHS = 2
    N_BATCHES = 4     # mini-batches processed per pallas_call via the grid axis

    key = jax.random.PRNGKey(0)
    k_x, k_p = jax.random.split(key)

    batch = jnp.concatenate([jnp.zeros((8,), jnp.int32), jnp.ones((8,), jnp.int32)])

    # Symmetric chain edges within each graph.
    src_list, dst_list = [], []
    for base in (0, 8):
        for i in range(7):
            src_list += [base + i, base + i + 1]
            dst_list += [base + i + 1, base + i]
    edge_index = jnp.array([src_list, dst_list], dtype=jnp.int32)

    a_hat = build_normalized_adjacency(edge_index, N_NODES)
    pool = build_mean_pool_matrix(batch, N_GRAPHS)
    params = init_params(k_p, NUM_NODE_FEATURES, NOUT, NHID, GRAPH_HIDDEN)

    # Stack N_BATCHES mini-batches (same topology, different node features).
    xs = jax.random.normal(k_x, (N_BATCHES, N_NODES, NUM_NODE_FEATURES), jnp.float32)
    a_hats = jnp.broadcast_to(a_hat, (N_BATCHES, N_NODES, N_NODES))
    pools = jnp.broadcast_to(pool, (N_BATCHES, N_GRAPHS, N_NODES))

    # One-time packing / padding (off the per-call hot path).
    packed = pack_graph_encoder_params(params)
    a_slab, p_slab, x_slab = prepare_graph_batches(a_hats, pools, xs, packed["D"])

    out = graph_encoder_pallas_batched(
        a_slab, p_slab, x_slab,
        packed["w_slab"], packed["b_slab"], packed["temp"],
        nout=packed["nout"], b_real=N_GRAPHS)
    out = jax.block_until_ready(out)
    assert out.shape == (N_BATCHES, N_GRAPHS, NOUT)

    ref_bf16 = jnp.stack([graph_encoder_reference_bf16(a_hats[i], pools[i], xs[i], params)
                          for i in range(N_BATCHES)])
    ref_f32 = jnp.stack([graph_encoder_reference_f32(a_hats[i], pools[i], xs[i], params)
                         for i in range(N_BATCHES)])
    assert jnp.allclose(out, ref_bf16, atol=2e-3, rtol=2e-3), "mismatch vs bf16 reference"
    assert jnp.allclose(out, ref_f32, atol=5e-2, rtol=5e-2), "mismatch vs f32 reference"

    print("KERNEL_OK")
</pallas_src>

<mosaic_0001>
module attributes {stable_mosaic.version = 11 : i64} {
  func.func @graph_encoder_kernel(%arg0: i32, %arg1: memref<1x128x128xbf16, #tpu.memory_space<vmem>>, %arg2: memref<1x8x128xbf16, #tpu.memory_space<vmem>>, %arg3: memref<1x128x128xbf16, #tpu.memory_space<vmem>>, %arg4: memref<6x128x128xbf16, #tpu.memory_space<vmem>>, %arg5: memref<8x128xf32, #tpu.memory_space<vmem>>, %arg6: memref<1x1xf32, #tpu.memory_space<smem>>, %arg7: memref<1x8x128xf32, #tpu.memory_space<vmem>>) attributes {dimension_semantics = [#tpu.dimension_semantics<parallel>], iteration_bounds = array<i64: 4>, scalar_prefetch = 0 : i64, scratch_operands = 0 : i64, tpu.core_type = #tpu.core_type<tc>, window_params = [{transform_indices = @transform_0, window_bounds = array<i64: 1, 128, 128>}, {transform_indices = @transform_1, window_bounds = array<i64: 1, 8, 128>}, {transform_indices = @transform_2, window_bounds = array<i64: 1, 128, 128>}, {pipeline_mode = #tpu.pipeline_mode<synchronous>, transform_indices = @transform_3, window_bounds = array<i64: 6, 128, 128>}, {pipeline_mode = #tpu.pipeline_mode<synchronous>, transform_indices = @transform_4, window_bounds = array<i64: 8, 128>}, {transform_indices = @transform_5, window_bounds = array<i64: 1, 1>}, {transform_indices = @transform_6, window_bounds = array<i64: 1, 8, 128>}]} {
    %c0 = arith.constant 0 : index
    %c0_0 = arith.constant 0 : index
    %c0_1 = arith.constant 0 : index
    %0 = vector.load %arg1[%c0, %c0_0, %c0_1] : memref<1x128x128xbf16, #tpu.memory_space<vmem>>, vector<1x128x128xbf16>
    %1 = vector.shape_cast %0 : vector<1x128x128xbf16> to vector<128x128xbf16>
    %c0_2 = arith.constant 0 : index
    %c0_3 = arith.constant 0 : index
    %c0_4 = arith.constant 0 : index
    %2 = vector.load %arg3[%c0_2, %c0_3, %c0_4] : memref<1x128x128xbf16, #tpu.memory_space<vmem>>, vector<1x128x128xbf16>
    %3 = vector.shape_cast %2 : vector<1x128x128xbf16> to vector<128x128xbf16>
    %cst = arith.constant dense<0.000000e+00> : vector<128x128xf32>
    %4 = tpu.matmul %1, %3, %cst {dimension_numbers = #tpu.dot_dimension_numbers<[1], [0], [0], [1], [0, 0, 1, 1], [], []>} : vector<128x128xbf16>, vector<128x128xbf16>, vector<128x128xf32> -> vector<128x128xf32>
    %5 = arith.truncf %4 : vector<128x128xf32> to vector<128x128xbf16>
    %c0_5 = arith.constant 0 : index
    %c0_6 = arith.constant 0 : index
    %c0_7 = arith.constant 0 : index
    %6 = vector.load %arg4[%c0_5, %c0_6, %c0_7] : memref<6x128x128xbf16, #tpu.memory_space<vmem>>, vector<1x128x128xbf16>
    %7 = vector.shape_cast %6 : vector<1x128x128xbf16> to vector<128x128xbf16>
    %cst_8 = arith.constant dense<0.000000e+00> : vector<128x128xf32>
    %8 = tpu.matmul %5, %7, %cst_8 {dimension_numbers = #tpu.dot_dimension_numbers<[1], [0], [0], [1], [0, 0, 1, 1], [], []>} : vector<128x128xbf16>, vector<128x128xbf16>, vector<128x128xf32> -> vector<128x128xf32>
    %c0_9 = arith.constant 0 : index
    %c0_10 = arith.constant 0 : index
    %9 = vector.load %arg5[%c0_9, %c0_10] : memref<8x128xf32, #tpu.memory_space<vmem>>, vector<1x128xf32>
    %10 = vector.broadcast %9 : vector<1x128xf32> to vector<128x128xf32>
    %11 = arith.addf %8, %10 : vector<128x128xf32>
    %cst_11 = arith.constant 0.000000e+00 : f32
    %12 = vector.broadcast %cst_11 : f32 to vector<128x128xf32>
    %13 = arith.maximumf %11, %12 : vector<128x128xf32>
    %14 = arith.truncf %13 : vector<128x128xf32> to vector<128x128xbf16>
    %c1 = arith.constant 1 : index
    %c0_12 = arith.constant 0 : index
    %c0_13 = arith.constant 0 : index
    %15 = vector.load %arg4[%c1, %c0_12, %c0_13] : memref<6x128x128xbf16, #tpu.memory_space<vmem>>, vector<1x128x128xbf16>
    %16 = vector.shape_cast %15 : vector<1x128x128xbf16> to vector<128x128xbf16>
    %cst_14 = arith.constant dense<0.000000e+00> : vector<128x128xf32>
    %17 = tpu.matmul %14, %16, %cst_14 {dimension_numbers = #tpu.dot_dimension_numbers<[1], [0], [0], [1], [0, 0, 1, 1], [], []>} : vector<128x128xbf16>, vector<128x128xbf16>, vector<128x128xf32> -> vector<128x128xf32>
    %18 = arith.truncf %17 : vector<128x128xf32> to vector<128x128xbf16>
    %cst_15 = arith.constant dense<0.000000e+00> : vector<128x128xf32>
    %19 = tpu.matmul %1, %18, %cst_15 {dimension_numbers = #tpu.dot_dimension_numbers<[1], [0], [0], [1], [0, 0, 1, 1], [], []>} : vector<128x128xbf16>, vector<128x128xbf16>, vector<128x128xf32> -> vector<128x128xf32>
    %c1_16 = arith.constant 1 : index
    %c0_17 = arith.constant 0 : index
    %20 = vector.load %arg5[%c1_16, %c0_17] : memref<8x128xf32, #tpu.memory_space<vmem>>, vector<1x128xf32>
    %21 = vector.broadcast %20 : vector<1x128xf32> to vector<128x128xf32>
    %22 = arith.addf %19, %21 : vector<128x128xf32>
    %cst_18 = arith.constant 0.000000e+00 : f32
    %23 = vector.broadcast %cst_18 : f32 to vector<128x128xf32>
    %24 = arith.maximumf %22, %23 : vector<128x128xf32>
    %25 = arith.truncf %24 : vector<128x128xf32> to vector<128x128xbf16>
    %c2 = arith.constant 2 : index
    %c0_19 = arith.constant 0 : index
    %c0_20 = arith.constant 0 : index
    %26 = vector.load %arg4[%c2, %c0_19, %c0_20] : memref<6x128x128xbf16, #tpu.memory_space<vmem>>, vector<1x128x128xbf16>
    %27 = vector.shape_cast %26 : vector<1x128x128xbf16> to vector<128x128xbf16>
    %cst_21 = arith.constant dense<0.000000e+00> : vector<128x128xf32>
    %28 = tpu.matmul %25, %27, %cst_21 {dimension_numbers = #tpu.dot_dimension_numbers<[1], [0], [0], [1], [0, 0, 1, 1], [], []>} : vector<128x128xbf16>, vector<128x128xbf16>, vector<128x128xf32> -> vector<128x128xf32>
    %29 = arith.truncf %28 : vector<128x128xf32> to vector<128x128xbf16>
    %cst_22 = arith.constant dense<0.000000e+00> : vector<128x128xf32>
    %30 = tpu.matmul %1, %29, %cst_22 {dimension_numbers = #tpu.dot_dimension_numbers<[1], [0], [0], [1], [0, 0, 1, 1], [], []>} : vector<128x128xbf16>, vector<128x128xbf16>, vector<128x128xf32> -> vector<128x128xf32>
    %c2_23 = arith.constant 2 : index
    %c0_24 = arith.constant 0 : index
    %31 = vector.load %arg5[%c2_23, %c0_24] : memref<8x128xf32, #tpu.memory_space<vmem>>, vector<1x128xf32>
    %32 = vector.broadcast %31 : vector<1x128xf32> to vector<128x128xf32>
    %33 = arith.addf %30, %32 : vector<128x128xf32>
    %c0_25 = arith.constant 0 : index
    %c0_26 = arith.constant 0 : index
    %c0_27 = arith.constant 0 : index
    %34 = vector.load %arg2[%c0_25, %c0_26, %c0_27] : memref<1x8x128xbf16, #tpu.memory_space<vmem>>, vector<1x8x128xbf16>
    %35 = vector.shape_cast %34 : vector<1x8x128xbf16> to vector<8x128xbf16>
    %36 = arith.truncf %33 : vector<128x128xf32> to vector<128x128xbf16>
    %cst_28 = arith.constant dense<0.000000e+00> : vector<8x128xf32>
    %37 = tpu.matmul %35, %36, %cst_28 {dimension_numbers = #tpu.dot_dimension_numbers<[1], [0], [0], [1], [0, 0, 1, 1], [], []>} : vector<8x128xbf16>, vector<128x128xbf16>, vector<8x128xf32> -> vector<8x128xf32>
    %38 = arith.truncf %37 : vector<8x128xf32> to vector<8x128xbf16>
    %c3 = arith.constant 3 : index
    %c0_29 = arith.constant 0 : index
    %c0_30 = arith.constant 0 : index
    %39 = vector.load %arg4[%c3, %c0_29, %c0_30] : memref<6x128x128xbf16, #tpu.memory_space<vmem>>, vector<1x128x128xbf16>
    %40 = vector.shape_cast %39 : vector<1x128x128xbf16> to vector<128x128xbf16>
    %cst_31 = arith.constant dense<0.000000e+00> : vector<8x128xf32>
    %41 = tpu.matmul %38, %40, %cst_31 {dimension_numbers = #tpu.dot_dimension_numbers<[1], [0], [0], [1], [0, 0, 1, 1], [], []>} : vector<8x128xbf16>, vector<128x128xbf16>, vector<8x128xf32> -> vector<8x128xf32>
    %c3_32 = arith.constant 3 : index
    %c0_33 = arith.constant 0 : index
    %42 = vector.load %arg5[%c3_32, %c0_33] : memref<8x128xf32, #tpu.memory_space<vmem>>, vector<1x128xf32>
    %43 = vector.broadcast %42 : vector<1x128xf32> to vector<8x128xf32>
    %44 = arith.addf %41, %43 : vector<8x128xf32>
    %cst_34 = arith.constant 0.000000e+00 : f32
    %45 = vector.broadcast %cst_34 : f32 to vector<8x128xf32>
    %46 = arith.maximumf %44, %45 : vector<8x128xf32>
    %47 = arith.truncf %46 : vector<8x128xf32> to vector<8x128xbf16>
    %c4 = arith.constant 4 : index
    %c0_35 = arith.constant 0 : index
    %c0_36 = arith.constant 0 : index
    %48 = vector.load %arg4[%c4, %c0_35, %c0_36] : memref<6x128x128xbf16, #tpu.memory_space<vmem>>, vector<1x128x128xbf16>
    %49 = vector.shape_cast %48 : vector<1x128x128xbf16> to vector<128x128xbf16>
    %cst_37 = arith.constant dense<0.000000e+00> : vector<8x128xf32>
    %50 = tpu.matmul %47, %49, %cst_37 {dimension_numbers = #tpu.dot_dimension_numbers<[1], [0], [0], [1], [0, 0, 1, 1], [], []>} : vector<8x128xbf16>, vector<128x128xbf16>, vector<8x128xf32> -> vector<8x128xf32>
    %c4_38 = arith.constant 4 : index
    %c0_39 = arith.constant 0 : index
    %51 = vector.load %arg5[%c4_38, %c0_39] : memref<8x128xf32, #tpu.memory_space<vmem>>, vector<1x128xf32>
    %52 = vector.broadcast %51 : vector<1x128xf32> to vector<8x128xf32>
    %53 = arith.addf %50, %52 : vector<8x128xf32>
    %cst_40 = arith.constant 0.000000e+00 : f32
    %54 = vector.broadcast %cst_40 : f32 to vector<8x128xf32>
    %55 = arith.maximumf %53, %54 : vector<8x128xf32>
    %56 = arith.truncf %55 : vector<8x128xf32> to vector<8x128xbf16>
    %c5 = arith.constant 5 : index
    %c0_41 = arith.constant 0 : index
    %c0_42 = arith.constant 0 : index
    %57 = vector.load %arg4[%c5, %c0_41, %c0_42] : memref<6x128x128xbf16, #tpu.memory_space<vmem>>, vector<1x128x128xbf16>
    %58 = vector.shape_cast %57 : vector<1x128x128xbf16> to vector<128x128xbf16>
    %cst_43 = arith.constant dense<0.000000e+00> : vector<8x128xf32>
    %59 = tpu.matmul %56, %58, %cst_43 {dimension_numbers = #tpu.dot_dimension_numbers<[1], [0], [0], [1], [0, 0, 1, 1], [], []>} : vector<8x128xbf16>, vector<128x128xbf16>, vector<8x128xf32> -> vector<8x128xf32>
    %c5_44 = arith.constant 5 : index
    %c0_45 = arith.constant 0 : index
    %60 = vector.load %arg5[%c5_44, %c0_45] : memref<8x128xf32, #tpu.memory_space<vmem>>, vector<1x128xf32>
    %61 = vector.broadcast %60 : vector<1x128xf32> to vector<8x128xf32>
    %62 = arith.addf %59, %61 : vector<8x128xf32>
    %63 = tpu.iota {dimensions = array<i32: 1>} : vector<8x128xi32>
    %c16_i32 = arith.constant 16 : i32
    %64 = vector.broadcast %c16_i32 : i32 to vector<8x128xi32>
    %65 = arith.cmpi slt, %63, %64 : vector<8x128xi32>
    %66 = arith.extui %65 : vector<8x128xi1> to vector<8x128xi32>
    %67 = arith.sitofp %66 : vector<8x128xi32> to vector<8x128xf32>
    %68 = arith.mulf %62, %67 : vector<8x128xf32>
    %cst_46 = arith.constant dense<0.000000e+00> : vector<8xf32>
    %69 = vector.multi_reduction <add>, %68, %cst_46 [1] : vector<8x128xf32> to vector<8xf32>
    %70 = vector.shape_cast %69 : vector<8xf32> to vector<8x1xf32>
    %cst_47 = arith.constant 6.250000e-02 : f32
    %71 = vector.broadcast %cst_47 : f32 to vector<8x1xf32>
    %72 = arith.mulf %70, %71 : vector<8x1xf32>
    %73 = vector.broadcast %72 : vector<8x1xf32> to vector<8x128xf32>
    %74 = arith.subf %68, %73 : vector<8x128xf32>
    %75 = arith.mulf %74, %67 : vector<8x128xf32>
    %76 = arith.mulf %75, %75 : vector<8x128xf32>
    %cst_48 = arith.constant dense<0.000000e+00> : vector<8xf32>
    %77 = vector.multi_reduction <add>, %76, %cst_48 [1] : vector<8x128xf32> to vector<8xf32>
    %78 = vector.shape_cast %77 : vector<8xf32> to vector<8x1xf32>
    %cst_49 = arith.constant 6.250000e-02 : f32
    %79 = vector.broadcast %cst_49 : f32 to vector<8x1xf32>
    %80 = arith.mulf %78, %79 : vector<8x1xf32>
    %cst_50 = arith.constant 9.99999974E-6 : f32
    %81 = vector.broadcast %cst_50 : f32 to vector<8x1xf32>
    %82 = arith.addf %80, %81 : vector<8x1xf32>
    %83 = math.rsqrt %82 : vector<8x1xf32>
    %84 = vector.broadcast %83 : vector<8x1xf32> to vector<8x128xf32>
    %85 = arith.mulf %75, %84 : vector<8x128xf32>
    %c6 = arith.constant 6 : index
    %c0_51 = arith.constant 0 : index
    %86 = vector.load %arg5[%c6, %c0_51] : memref<8x128xf32, #tpu.memory_space<vmem>>, vector<1x128xf32>
    %87 = vector.broadcast %86 : vector<1x128xf32> to vector<8x128xf32>
    %88 = arith.mulf %85, %87 : vector<8x128xf32>
    %c7 = arith.constant 7 : index
    %c0_52 = arith.constant 0 : index
    %89 = vector.load %arg5[%c7, %c0_52] : memref<8x128xf32, #tpu.memory_space<vmem>>, vector<1x128xf32>
    %90 = vector.broadcast %89 : vector<1x128xf32> to vector<8x128xf32>
    %91 = arith.addf %88, %90 : vector<8x128xf32>
    %c0_53 = arith.constant 0 : index
    %c0_54 = arith.constant 0 : index
    %92 = memref.load %arg6[%c0_53, %c0_54] : memref<1x1xf32, #tpu.memory_space<smem>>
    %93 = math.exp %92 : f32
    %94 = vector.broadcast %93 : f32 to vector<8x128xf32>
    %95 = arith.mulf %91, %94 : vector<8x128xf32>
    %c0_55 = arith.constant 0 : index
    %c0_56 = arith.constant 0 : index
    %c0_57 = arith.constant 0 : index
    %96 = vector.load %arg7[%c0_55, %c0_56, %c0_57] : memref<1x8x128xf32, #tpu.memory_space<vmem>>, vector<1x8x128xf32>
    %97 = vector.shape_cast %96 : vector<1x8x128xf32> to vector<8x128xf32>
    %98 = vector.shape_cast %95 : vector<8x128xf32> to vector<1x8x128xf32>
    tpu.vector_store %arg7[%c0_55, %c0_56, %c0_57], %98 {strides = array<i32>} : memref<1x8x128xf32, #tpu.memory_space<vmem>>, vector<1x8x128xf32>,
    return
  }
  func.func @transform_0(%arg0: i32) -> (i32, i32, i32) {
    %c0_i32 = arith.constant 0 : i32
    %c0_i32_0 = arith.constant 0 : i32
    %c0_i32_1 = arith.constant 0 : i32
    return %arg0, %c0_i32, %c0_i32_0 : i32, i32, i32
  }
  func.func @transform_1(%arg0: i32) -> (i32, i32, i32) {
    %c0_i32 = arith.constant 0 : i32
    %c0_i32_0 = arith.constant 0 : i32
    %c0_i32_1 = arith.constant 0 : i32
    return %arg0, %c0_i32, %c0_i32_0 : i32, i32, i32
  }
  func.func @transform_2(%arg0: i32) -> (i32, i32, i32) {
    %c0_i32 = arith.constant 0 : i32
    %c0_i32_0 = arith.constant 0 : i32
    %c0_i32_1 = arith.constant 0 : i32
    return %arg0, %c0_i32, %c0_i32_0 : i32, i32, i32
  }
  func.func @transform_3(%arg0: i32) -> (i32, i32, i32) {
    %c0_i32 = arith.constant 0 : i32
    %c0_i32_0 = arith.constant 0 : i32
    %c0_i32_1 = arith.constant 0 : i32
    %c0_i32_2 = arith.constant 0 : i32
    return %c0_i32, %c0_i32_0, %c0_i32_1 : i32, i32, i32
  }
  func.func @transform_4(%arg0: i32) -> (i32, i32) {
    %c0_i32 = arith.constant 0 : i32
    %c0_i32_0 = arith.constant 0 : i32
    %c0_i32_1 = arith.constant 0 : i32
    return %c0_i32, %c0_i32_0 : i32, i32
  }
  func.func @transform_5(%arg0: i32) -> (i32, i32) {
    %c0_i32 = arith.constant 0 : i32
    %c0_i32_0 = arith.constant 0 : i32
    %c0_i32_1 = arith.constant 0 : i32
    return %c0_i32, %c0_i32_0 : i32, i32
  }
  func.func @transform_6(%arg0: i32) -> (i32, i32, i32) {
    %c0_i32 = arith.constant 0 : i32
    %c0_i32_0 = arith.constant 0 : i32
    %c0_i32_1 = arith.constant 0 : i32
    return %arg0, %c0_i32, %c0_i32_0 : i32, i32, i32
  }
}

</mosaic_0001>

<llo_original>
// kernel: graph_encoder_pallas_batched.1
$region0: #{graph_encoder_pallas_batched.1}
  #allocation0 [shape = 'u32[]', space=smem, size = 0x4, offset = 0x4, fixed_abs, tag = 'smem constant byte address 0x4 - core index']
  #allocation1 [shape = 'u32[144,128]{1,0:T(1,128)}', space=vmem, size = 0x12000, scoped, tag = 'internal scratch']
  #allocation2 [shape = 'f32[1,1]{1,0:T(1,128)S(6)}', space=smem, size = 0x200, scoped, tag = 'scoped memory for graph_encoder_pallas_batched.1']
  %s0 = inlined_call_operand.hbm [shape: bf16[4,128,128], index: 0, kind: input, shape index: {}]
  %s1 = inlined_call_operand.hbm [shape: bf16[4,8,128], index: 1, kind: input, shape index: {}]
  %s2 = inlined_call_operand.hbm [shape: bf16[4,128,128], index: 2, kind: input, shape index: {}]
  %s3 = inlined_call_operand.hbm [shape: bf16[6,128,128], index: 3, kind: input, shape index: {}]
  %s4 = inlined_call_operand.vmem [shape: f32[8,128], index: 4, kind: input, shape index: {}]
  %s5 = inlined_call_operand.<no memory space> [shape: f32[1,1], index: 5, kind: input, shape index: {}]
  %s6 = inlined_call_operand.vmem [shape: f32[4,8,128], index: 6, kind: output, shape index: {}]
  %s7 = sld [smem:[#allocation0]]
  $region73: #{graph_encoder_pallas_batched.1} parent=0
    _
  %s9 = ssub.s32 1, %s7
  %s10 = scalar_select 0, %s9, %s7
  %11 = sst [smem:[#allocation2]] %s5
  $region1: #{graph_encoder_pallas_batched.1} parent=0
    #allocation3 [shape = 'u8[65536]{0}', space=vmem, size = 0x10000, scoped, tag = 'input window, operand 0']
    #allocation4 [shape = 's32[2]{0}', space=sflag, size = 0x8, scoped, tag = 'scoped memory for graph_encoder_pallas_batched.1']
    #allocation5 [shape = 'u8[4096]{0}', space=vmem, size = 0x1000, scoped, tag = 'input window, operand 1']
    #allocation6 [shape = 's32[2]{0}', space=sflag, size = 0x8, scoped, tag = 'scoped memory for graph_encoder_pallas_batched.1']
    #allocation7 [shape = 'u8[65536]{0}', space=vmem, size = 0x10000, scoped, tag = 'input window, operand 2']
    #allocation8 [shape = 'u8[196608]{0}', space=vmem, size = 0x30000, scoped, tag = 'input window, operand 3, single buffered']
    #allocation9 [shape = 's32[1]{0}', space=sflag, size = 0x4, scoped, tag = 'scoped memory for graph_encoder_pallas_batched.1']
    %12 = vsyncpa [#allocation4], 0
    %s13 = scalar_lea.sflag [#allocation4], 1
    %14 = vsyncpa %s13, 0
    %15 = vsyncpa [#allocation6], 0
    %s16 = scalar_lea.sflag [#allocation6], 1
    %17 = vsyncpa %s16, 0
    %18 = vsyncpa [#allocation9], 0
    loop: start=0, step=1, limit=6
    $region2: #{graph_encoder_pallas_batched.1} parent=1 // loop_pre_header
      _
    $region3: #{graph_encoder_pallas_batched.1} parent=1 // loop_header
      %s20 = sphi 0, %s24
      %p21 = scmp.ge.s32.totalorder %s20, 6
      %s30 = sphi 0, %s32
      %s33 = sphi 0, %s30
      %s34 = sphi 0, %s33
      %s50 = sphi 0, %s34
      %s56 = sphi 0, %s58
      %s59 = sphi 0, %s56
      %s60 = sphi 0, %s59
      %s76 = sphi 0, %s60
      %s82 = sphi 0, %s84
      %s85 = sphi 0, %s82
      %s86 = sphi 0, %s85
      %s102 = sphi 0, %s86
      %s106 = sphi 0, %s106
      %s108 = sphi 0, %s106
      %s109 = sphi 0, %s108
      %s123 = sphi 0, %s109
      %s127 = sphi 0, %s127
      %s129 = sphi 0, %s127
      %s130 = sphi 0, %s129
      %s144 = sphi 0, %s130
      %s148 = sphi 0, %s148
      %s150 = sphi 0, %s148
      %s151 = sphi 0, %s150
      %s165 = sphi 0, %s151
      %s171 = sphi 0, %s173
      %s174 = sphi 0, %s171
      %s175 = sphi 0, %s174
      %s191 = sphi 0, %s175
    $region4: #{graph_encoder_pallas_batched.1} parent=1 // loop_header_branch
      %23 = sbr.rel (%p21) target = $region8
    $region5: #{graph_encoder_pallas_batched.1} parent=1 // loop_body
      %s25 = ssub.s32 %s20, 1
      %s26 = ssub.s32 %s20, 2
      %s27 = sadd.s32 %s20, 1
      %s28 = ssub.s32 %s20, %s27
      %p29 = scmp.eq.s32.totalorder %s28, 0
      %s31 = sadd.s32 %s30, 1
      %s32 = scalar_select %p29, %s30, %s31
      %p35 = pneg %p29
      %p36 = scmp.eq.s32.totalorder %s20, 3
      %p37 = por %p35, %p36
      %p38 = scmp.ne.s32.totalorder %s30, %s33
      %p39 = scmp.eq.s32.totalorder %s20, 0
      %p40 = por %p38, %p39
      %p41 = scmp.ne.s32.totalorder %s30, %s33
      %p42 = scmp.eq.s32.totalorder %s25, 3
      %p43 = por %p41, %p42
      %p44 = scmp.ne.s32.totalorder %s33, %s34
      %p45 = scmp.eq.s32.totalorder %s25, 0
      %p46 = por %p44, %p45
      %p47 = scmp.ne.s32.totalorder %s33, %s34
      %p48 = scmp.eq.s32.totalorder %s26, 3
      %p49 = por %p47, %p48
      %p51 = scmp.ne.s32.totalorder %s34, %s50
      %p52 = scmp.eq.s32.totalorder %s26, 0
      %p53 = por %p51, %p52
      %s54 = ssub.s32 %s20, %s27
      %p55 = scmp.eq.s32.totalorder %s54, 0
      %s57 = sadd.s32 %s56, 1
      %s58 = scalar_select %p55, %s56, %s57
      %p61 = pneg %p55
      %p62 = scmp.eq.s32.totalorder %s20, 3
      %p63 = por %p61, %p62
      %p64 = scmp.ne.s32.totalorder %s56, %s59
      %p65 = scmp.eq.s32.totalorder %s20, 0
      %p66 = por %p64, %p65
      %p67 = scmp.ne.s32.totalorder %s56, %s59
      %p68 = scmp.eq.s32.totalorder %s25, 3
      %p69 = por %p67, %p68
      %p70 = scmp.ne.s32.totalorder %s59, %s60
      %p71 = scmp.eq.s32.totalorder %s25, 0
      %p72 = por %p70, %p71
      %p73 = scmp.ne.s32.totalorder %s59, %s60
      %p74 = scmp.eq.s32.totalorder %s26, 3
      %p75 = por %p73, %p74
      %p77 = scmp.ne.s32.totalorder %s60, %s76
      %p78 = scmp.eq.s32.totalorder %s26, 0
      %p79 = por %p77, %p78
      %s80 = ssub.s32 %s20, %s27
      %p81 = scmp.eq.s32.totalorder %s80, 0
      %s83 = sadd.s32 %s82, 1
      %s84 = scalar_select %p81, %s82, %s83
      %p87 = pneg %p81
      %p88 = scmp.eq.s32.totalorder %s20, 3
      %p89 = por %p87, %p88
      %p90 = scmp.ne.s32.totalorder %s82, %s85
      %p91 = scmp.eq.s32.totalorder %s20, 0
      %p92 = por %p90, %p91
      %p93 = scmp.ne.s32.totalorder %s82, %s85
      %p94 = scmp.eq.s32.totalorder %s25, 3
      %p95 = por %p93, %p94
      %p96 = scmp.ne.s32.totalorder %s85, %s86
      %p97 = scmp.eq.s32.totalorder %s25, 0
      %p98 = por %p96, %p97
      %p99 = scmp.ne.s32.totalorder %s85, %s86
      %p100 = scmp.eq.s32.totalorder %s26, 3
      %p101 = por %p99, %p100
      %p103 = scmp.ne.s32.totalorder %s86, %s102
      %p104 = scmp.eq.s32.totalorder %s26, 0
      %p105 = por %p103, %p104
      %s107 = sadd.s32 %s106, 1
      %p110 = scmp.eq.s32.totalorder %s20, 3
      %p111 = scmp.ne.s32.totalorder %s106, %s108
      %p112 = scmp.eq.s32.totalorder %s20, 0
      %p113 = por %p111, %p112
      %p114 = scmp.ne.s32.totalorder %s106, %s108
      %p115 = scmp.eq.s32.totalorder %s25, 3
      %p116 = por %p114, %p115
      %p117 = scmp.ne.s32.totalorder %s108, %s109
      %p118 = scmp.eq.s32.totalorder %s25, 0
      %p119 = por %p117, %p118
      %p120 = scmp.ne.s32.totalorder %s108, %s109
      %p121 = scmp.eq.s32.totalorder %s26, 3
      %p122 = por %p120, %p121
      %p124 = scmp.ne.s32.totalorder %s109, %s123
      %p125 = scmp.eq.s32.totalorder %s26, 0
      %p126 = por %p124, %p125
      %s128 = sadd.s32 %s127, 1
      %p131 = scmp.eq.s32.totalorder %s20, 3
      %p132 = scmp.ne.s32.totalorder %s127, %s129
      %p133 = scmp.eq.s32.totalorder %s20, 0
      %p134 = por %p132, %p133
      %p135 = scmp.ne.s32.totalorder %s127, %s129
      %p136 = scmp.eq.s32.totalorder %s25, 3
      %p137 = por %p135, %p136
      %p138 = scmp.ne.s32.totalorder %s129, %s130
      %p139 = scmp.eq.s32.totalorder %s25, 0
      %p140 = por %p138, %p139
      %p141 = scmp.ne.s32.totalorder %s129, %s130
      %p142 = scmp.eq.s32.totalorder %s26, 3
      %p143 = por %p141, %p142
      %p145 = scmp.ne.s32.totalorder %s130, %s144
      %p146 = scmp.eq.s32.totalorder %s26, 0
      %p147 = por %p145, %p146
      %s149 = sadd.s32 %s148, 1
      %p152 = scmp.eq.s32.totalorder %s20, 3
      %p153 = scmp.ne.s32.totalorder %s148, %s150
      %p154 = scmp.eq.s32.totalorder %s20, 0
      %p155 = por %p153, %p154
      %p156 = scmp.ne.s32.totalorder %s148, %s150
      %p157 = scmp.eq.s32.totalorder %s25, 3
      %p158 = por %p156, %p157
      %p159 = scmp.ne.s32.totalorder %s150, %s151
      %p160 = scmp.eq.s32.totalorder %s25, 0
      %p161 = por %p159, %p160
      %p162 = scmp.ne.s32.totalorder %s150, %s151
      %p163 = scmp.eq.s32.totalorder %s26, 3
      %p164 = por %p162, %p163
      %p166 = scmp.ne.s32.totalorder %s151, %s165
      %p167 = scmp.eq.s32.totalorder %s26, 0
      %p168 = por %p166, %p167
      %s169 = ssub.s32 %s20, %s27
      %p170 = scmp.eq.s32.totalorder %s169, 0
      %s172 = sadd.s32 %s171, 1
      %s173 = scalar_select %p170, %s171, %s172
      %p176 = pneg %p170
      %p177 = scmp.eq.s32.totalorder %s20, 3
      %p178 = por %p176, %p177
      %p179 = scmp.ne.s32.totalorder %s171, %s174
      %p180 = scmp.eq.s32.totalorder %s20, 0
      %p181 = por %p179, %p180
      %p182 = scmp.ne.s32.totalorder %s171, %s174
      %p183 = scmp.eq.s32.totalorder %s25, 3
      %p184 = por %p182, %p183
      %p185 = scmp.ne.s32.totalorder %s174, %s175
      %p186 = scmp.eq.s32.totalorder %s25, 0
      %p187 = por %p185, %p186
      %p188 = scmp.ne.s32.totalorder %s174, %s175
      %p189 = scmp.eq.s32.totalorder %s26, 3
      %p190 = por %p188, %p189
      %p192 = scmp.ne.s32.totalorder %s175, %s191
      %p193 = scmp.eq.s32.totalorder %s26, 0
      %p194 = por %p192, %p193
      %p195 = scmp.le.s32.totalorder 1, %s20
      %p196 = scmp.lt.s32.totalorder %s20, 5
      %p197 = pnand %p195, %p196
      %p198 = pneg %p197
      // Predicated region
      $region9: #{graph_encoder_pallas_batched.1} parent=5 // pred_check
        _
      $region10: #{graph_encoder_pallas_batched.1} parent=5 // pred_check_branch
        %200 = sbr.rel (%p197) target = $region12
      $region11: #{graph_encoder_pallas_batched.1} parent=5 // pred_region
        %s201 = ssub.s32 %s20, 1
        // Predicated region
        $region13: #{graph_encoder_pallas_batched.1} parent=11 // pred_check
          %p202 = pneg %p119
        $region14: #{graph_encoder_pallas_batched.1} parent=11 // pred_check_branch
          %204 = sbr.rel (%p202) target = $region16
        $region15: #{graph_encoder_pallas_batched.1} parent=11 // pred_region
          %s206 = ssub.s32 6144, 6144
          %207 = vsyncadd [#allocation9], %s206
          %s208 = sshll.u32 [#allocation8], 4
          %s209 = int_to_ptr.vmem [resolvable:$true] %s208
          %214 = dma.hbm_to_vmem [thread:$0]  %s3, 6144, %s209, [#allocation9], 64, 64, 4
        $region16: #{graph_encoder_pallas_batched.1} parent=11 // pred_fallthru
          _
        // Predicated region
        $region17: #{graph_encoder_pallas_batched.1} parent=11 // pred_check
          %p215 = pneg %p140
        $region18: #{graph_encoder_pallas_batched.1} parent=11 // pred_check_branch
          %217 = sbr.rel (%p215) target = $region20
        $region19: #{graph_encoder_pallas_batched.1} parent=11 // pred_region
          _
        $region20: #{graph_encoder_pallas_batched.1} parent=11 // pred_fallthru
          _
        // Predicated region
        $region21: #{graph_encoder_pallas_batched.1} parent=11 // pred_check
          %p218 = pneg %p161
        $region22: #{graph_encoder_pallas_batched.1} parent=11 // pred_check_branch
          %220 = sbr.rel (%p218) target = $region24
        $region23: #{graph_encoder_pallas_batched.1} parent=11 // pred_region
          _
        $region24: #{graph_encoder_pallas_batched.1} parent=11 // pred_fallthru
          _
      $region12: #{graph_encoder_pallas_batched.1} parent=5 // pred_fallthru
        _
      %p221 = scmp.lt.s32.totalorder %s20, 4
      // Predicated region
      $region25: #{graph_encoder_pallas_batched.1} parent=5 // pred_check
        %p222 = pneg %p221
      $region26: #{graph_encoder_pallas_batched.1} parent=5 // pred_check_branch
        %224 = sbr.rel (%p222) target = $region28
      $region27: #{graph_encoder_pallas_batched.1} parent=5 // pred_region
        // Predicated region
        $region29: #{graph_encoder_pallas_batched.1} parent=27 // pred_check
          %p225 = pneg %p40
        $region30: #{graph_encoder_pallas_batched.1} parent=27 // pred_check_branch
          %227 = sbr.rel (%p225) target = $region32
        $region31: #{graph_encoder_pallas_batched.1} parent=27 // pred_region
          %s228 = sand.u32 %s30, 1
          %s229 = scalar_lea.sflag [#allocation4], %s228
          %s230 = sand.u32 %s30, 1
          %s231 = smul.addr %s230, 64
          %s232 = scalar_lea.vmem [#allocation3], %s231
          %s234 = ssub.s32 1024, 1024
          %235 = vsyncadd %s229, %s234
          %s236 = smul.addr %s20, 16
          %s237 = smul.addr %s236, 64
          %s238 = scalar_lea.hbm %s0, %s237
          %s239 = sshll.u32 %s232, 4
          %s240 = int_to_ptr.vmem [resolvable:$true] %s239
          %245 = dma.hbm_to_vmem [thread:$0]  %s238, 1024, %s240, %s229, 64, 64, 4
        $region32: #{graph_encoder_pallas_batched.1} parent=27 // pred_fallthru
          _
        // Predicated region
        $region33: #{graph_encoder_pallas_batched.1} parent=27 // pred_check
          %p246 = pneg %p66
        $region34: #{graph_encoder_pallas_batched.1} parent=27 // pred_check_branch
          %248 = sbr.rel (%p246) target = $region36
        $region35: #{graph_encoder_pallas_batched.1} parent=27 // pred_region
          %s249 = sand.u32 %s20, 1
          %s250 = scalar_lea.sflag [#allocation6], %s249
          %s251 = sand.u32 %s56, 1
          %s252 = smul.addr %s251, 4
          %s253 = scalar_lea.vmem [#allocation5], %s252
          %s255 = ssub.s32 64, 64
          %256 = vsyncadd %s250, %s255
          %s257 = smul.addr %s20, 64
          %s258 = scalar_lea.hbm %s1, %s257
          %s260 = sshll.u32 %s253, 4
          %s261 = int_to_ptr.vmem [resolvable:$true] %s260
          %263 = dma.hbm_to_vmem [thread:$0]  %s258, 64, %s261, %s250
        $region36: #{graph_encoder_pallas_batched.1} parent=27 // pred_fallthru
          _
        // Predicated region
        $region37: #{graph_encoder_pallas_batched.1} parent=27 // pred_check
          %p264 = pneg %p92
        $region38: #{graph_encoder_pallas_batched.1} parent=27 // pred_check_branch
          %266 = sbr.rel (%p264) target = $region40
        $region39: #{graph_encoder_pallas_batched.1} parent=27 // pred_region
          %s267 = sand.u32 %s20, 1
          %s268 = scalar_lea.sflag [#allocation6], %s267
          %s269 = sand.u32 %s82, 1
          %s270 = smul.addr %s269, 64
          %s271 = scalar_lea.vmem [#allocation7], %s270
          %s273 = ssub.s32 1024, 1024
          %274 = vsyncadd %s268, %s273
          %s275 = smul.addr %s20, 16
          %s276 = smul.addr %s275, 64
          %s277 = scalar_lea.hbm %s2, %s276
          %s278 = sshll.u32 %s271, 4
          %s279 = int_to_ptr.vmem [resolvable:$true] %s278
          %284 = dma.hbm_to_vmem [thread:$0]  %s277, 1024, %s279, %s268, 64, 64, 4
        $region40: #{graph_encoder_pallas_batched.1} parent=27 // pred_fallthru
          _
      $region28: #{graph_encoder_pallas_batched.1} parent=5 // pred_fallthru
        _
      %p285 = scmp.le.s32.totalorder 1, %s20
      %p286 = scmp.lt.s32.totalorder %s20, 5
      %p287 = pnand %p285, %p286
      %p288 = pneg %p287
      // Predicated region
      $region41: #{graph_encoder_pallas_batched.1} parent=5 // pred_check
        _
      $region42: #{graph_encoder_pallas_batched.1} parent=5 // pred_check_branch
        %290 = sbr.rel (%p287) target = $region44
      $region43: #{graph_encoder_pallas_batched.1} parent=5 // pred_region
        %s291 = ssub.s32 %s20, 1
        %s292 = sand.u32 %s33, 1
        %s293 = scalar_lea.sflag [#allocation4], %s292
        %s294 = sand.u32 %s33, 1
        %s295 = smul.addr %s294, 64
        %s296 = scalar_lea.vmem [#allocation3], %s295
        // Predicated region
        $region45: #{graph_encoder_pallas_batched.1} parent=43 // pred_check
          %p297 = pneg %p46
        $region46: #{graph_encoder_pallas_batched.1} parent=43 // pred_check_branch
          %299 = sbr.rel (%p297) target = $region48
        $region47: #{graph_encoder_pallas_batched.1} parent=43 // pred_region
          %300 = dma.done %s293, 1024
        $region48: #{graph_encoder_pallas_batched.1} parent=43 // pred_fallthru
          _
        %s301 = sand.u32 %s25, 1
        %s302 = scalar_lea.sflag [#allocation6], %s301
        %s303 = sand.u32 %s59, 1
        %s304 = smul.addr %s303, 4
        %s305 = scalar_lea.vmem [#allocation5], %s304
        // Predicated region
        $region49: #{graph_encoder_pallas_batched.1} parent=43 // pred_check
          %p306 = pneg %p72
        $region50: #{graph_encoder_pallas_batched.1} parent=43 // pred_check_branch
          %308 = sbr.rel (%p306) target = $region52
        $region51: #{graph_encoder_pallas_batched.1} parent=43 // pred_region
          %309 = dma.done %s302, 64
        $region52: #{graph_encoder_pallas_batched.1} parent=43 // pred_fallthru
          _
        %s310 = sand.u32 %s25, 1
        %s311 = scalar_lea.sflag [#allocation6], %s310
        %s312 = sand.u32 %s85, 1
        %s313 = smul.addr %s312, 64
        %s314 = scalar_lea.vmem [#allocation7], %s313
        // Predicated region
        $region53: #{graph_encoder_pallas_batched.1} parent=43 // pred_check
          %p315 = pneg %p98
        $region54: #{graph_encoder_pallas_batched.1} parent=43 // pred_check_branch
          %317 = sbr.rel (%p315) target = $region56
        $region55: #{graph_encoder_pallas_batched.1} parent=43 // pred_region
          %318 = dma.done %s311, 1024
        $region56: #{graph_encoder_pallas_batched.1} parent=43 // pred_fallthru
          _
        // Predicated region
        $region57: #{graph_encoder_pallas_batched.1} parent=43 // pred_check
          %p319 = pneg %p119
        $region58: #{graph_encoder_pallas_batched.1} parent=43 // pred_check_branch
          %321 = sbr.rel (%p319) target = $region60
        $region59: #{graph_encoder_pallas_batched.1} parent=43 // pred_region
          %322 = dma.done [#allocation9], 6144
        $region60: #{graph_encoder_pallas_batched.1} parent=43 // pred_fallthru
          _
        %s323 = sand.u32 %s33, 1
        %s324 = scalar_lea.sflag [#allocation4], %s323
        %s325 = sand.u32 %s33, 1
        %s326 = smul.addr %s325, 64
        %s327 = scalar_lea.vmem [#allocation3], %s326
        %p328 = pneg %p46
        %p329 = pneg %p43
        %s330 = sand.u32 %s25, 1
        %s331 = scalar_lea.sflag [#allocation6], %s330
        %s332 = sand.u32 %s59, 1
        %s333 = smul.addr %s332, 4
        %s334 = scalar_lea.vmem [#allocation5], %s333
        %p335 = pneg %p72
        %p336 = pneg %p69
        %s337 = sand.u32 %s25, 1
        %s338 = scalar_lea.sflag [#allocation6], %s337
        %s339 = sand.u32 %s85, 1
        %s340 = smul.addr %s339, 64
        %s341 = scalar_lea.vmem [#allocation7], %s340
        %p342 = pneg %p98
        %p343 = pneg %p95
        %p344 = pneg %p119
        %p345 = pneg %p116
        %p346 = pneg %p140
        %p347 = pneg %p137
        %p348 = pneg %p161
        %p349 = pneg %p158
        %p350 = pneg %p187
        %p351 = pneg %p184
        %p352 = scmp.lt.s32.totalorder %s25, 3
        %s353 = scalar_select %p352, %s25, 3
        %s354 = smul.addr %s353, 8
        %s355 = scalar_lea.vmem %s6, %s354
        %p356 = scmp.lt.s32.totalorder %s25, 3
        %s357 = scalar_select %p356, %s25, 3
        %s358 = smul.addr %s357, 8
        %s359 = scalar_lea.vmem %s6, %s358
        %v361 = vld [vmem:[%s296] sm:$0xf]
        %v362 = vld [vmem:[%s296 + $0x4] sm:$0xf]
        %v363 = vld [vmem:[%s296 + $0x8] sm:$0xf]
        %v364 = vld [vmem:[%s296 + $0xc] sm:$0xf]
        %v365 = vld [vmem:[%s296 + $0x10] sm:$0xf]
        %v366 = vld [vmem:[%s296 + $0x14] sm:$0xf]
        %v367 = vld [vmem:[%s296 + $0x18] sm:$0xf]
        %v368 = vld [vmem:[%s296 + $0x1c] sm:$0xf]
        %v369 = vld [vmem:[%s296 + $0x20] sm:$0xf]
        %v370 = vld [vmem:[%s296 + $0x24] sm:$0xf]
        %v371 = vld [vmem:[%s296 + $0x28] sm:$0xf]
        %v372 = vld [vmem:[%s296 + $0x2c] sm:$0xf]
        %v373 = vld [vmem:[%s296 + $0x30] sm:$0xf]
        %v374 = vld [vmem:[%s296 + $0x34] sm:$0xf]
        %v375 = vld [vmem:[%s296 + $0x38] sm:$0xf]
        %v376 = vld [vmem:[%s296 + $0x3c] sm:$0xf]
        %v377 = vld [vmem:[%s314] sm:$0xf]
        %v378 = vld [vmem:[%s314 + $0x4] sm:$0xf]
        %v379 = vld [vmem:[%s314 + $0x8] sm:$0xf]
        %v380 = vld [vmem:[%s314 + $0xc] sm:$0xf]
        %v381 = vld [vmem:[%s314 + $0x10] sm:$0xf]
        %v382 = vld [vmem:[%s314 + $0x14] sm:$0xf]
        %v383 = vld [vmem:[%s314 + $0x18] sm:$0xf]
        %v384 = vld [vmem:[%s314 + $0x1c] sm:$0xf]
        %v385 = vld [vmem:[%s314 + $0x20] sm:$0xf]
        %v386 = vld [vmem:[%s314 + $0x24] sm:$0xf]
        %v387 = vld [vmem:[%s314 + $0x28] sm:$0xf]
        %v388 = vld [vmem:[%s314 + $0x2c] sm:$0xf]
        %v389 = vld [vmem:[%s314 + $0x30] sm:$0xf]
        %v390 = vld [vmem:[%s314 + $0x34] sm:$0xf]
        %v391 = vld [vmem:[%s314 + $0x38] sm:$0xf]
        %v392 = vld [vmem:[%s314 + $0x3c] sm:$0xf]
        %v409 = vunpack.c.l.b16 %v361
        %v410 = vunpack.c.l.b16 %v362
        %v411 = vunpack.c.l.b16 %v363
        %v412 = vunpack.c.l.b16 %v364
        %v413 = vunpack.c.l.b16 %v365
        %v414 = vunpack.c.l.b16 %v366
        %v415 = vunpack.c.l.b16 %v367
        %v416 = vunpack.c.l.b16 %v368
        %v417 = vunpack.c.l.b16 %v369
        %v418 = vunpack.c.l.b16 %v370
        %v419 = vunpack.c.l.b16 %v371
        %v420 = vunpack.c.l.b16 %v372
        %v421 = vunpack.c.l.b16 %v373
        %v422 = vunpack.c.l.b16 %v374
        %v423 = vunpack.c.l.b16 %v375
        %v424 = vunpack.c.l.b16 %v376
        %v425 = vpack.c.b16 %v410, %v409
        %v426 = vpack.c.b16 %v412, %v411
        %v427 = vpack.c.b16 %v414, %v413
        %v428 = vpack.c.b16 %v416, %v415
        %v429 = vpack.c.b16 %v418, %v417
        %v430 = vpack.c.b16 %v420, %v419
        %v431 = vpack.c.b16 %v422, %v421
        %v432 = vpack.c.b16 %v424, %v423
        %v457 = vunpack.c.l.b16 %v377
        %v458 = vunpack.c.l.b16 %v378
        %v459 = vunpack.c.l.b16 %v379
        %v460 = vunpack.c.l.b16 %v380
        %v461 = vunpack.c.l.b16 %v381
        %v462 = vunpack.c.l.b16 %v382
        %v463 = vunpack.c.l.b16 %v383
        %v464 = vunpack.c.l.b16 %v384
        %v465 = vunpack.c.l.b16 %v385
        %v466 = vunpack.c.l.b16 %v386
        %v467 = vunpack.c.l.b16 %v387
        %v468 = vunpack.c.l.b16 %v388
        %v469 = vunpack.c.l.b16 %v389
        %v470 = vunpack.c.l.b16 %v390
        %v471 = vunpack.c.l.b16 %v391
        %v472 = vunpack.c.l.b16 %v392
        %v473 = vpack.c.b16 %v458, %v457
        %v474 = vpack.c.b16 %v460, %v459
        %v475 = vpack.c.b16 %v462, %v461
        %v476 = vpack.c.b16 %v464, %v463
        %v477 = vpack.c.b16 %v466, %v465
        %v478 = vpack.c.b16 %v468, %v467
        %v479 = vpack.c.b16 %v470, %v469
        %v480 = vpack.c.b16 %v472, %v471
        %489 = vmatprep.subr.bf16.mxu0 0
        %490 = vmatpush1.bf16.msra.mxu0 %v480
        %491 = vmatprep.subr.bf16.mxu0 0
        %492 = vmatpush1.bf16.msra.mxu0 %v479
        %493 = vmatprep.subr.bf16.mxu0 0
        %494 = vmatpush1.bf16.msra.mxu0 %v478
        %495 = vmatprep.subr.bf16.mxu0 0
        %496 = vmatpush1.bf16.msra.mxu0 %v477
        %497 = vmatprep.subr.bf16.mxu0 0
        %498 = vmatpush1.bf16.msra.mxu0 %v476
        %499 = vmatprep.subr.bf16.mxu0 0
        %500 = vmatpush1.bf16.msra.mxu0 %v475
        %501 = vmatprep.subr.bf16.mxu0 0
        %502 = vmatpush1.bf16.msra.mxu0 %v474
        %503 = vmatprep.subr.bf16.mxu0 0
        %504 = vmatpush1.bf16.msra.mxu0 %v473
        %505 = vmatprep.subr.bf16.mxu0 0
        %506 = vmatpush2.bf16.msra.mxu0 0
        %507 = vmatprep.subr.bf16.mxu0 0
        %508 = vmatpush2.bf16.msra.mxu0 0
        %509 = vmatprep.subr.bf16.mxu0 0
        %510 = vmatpush2.bf16.msra.mxu0 0
        %511 = vmatprep.subr.bf16.mxu0 0
        %512 = vmatpush2.bf16.msra.mxu0 0
        %513 = vmatprep.subr.bf16.mxu0 0
        %514 = vmatpush2.bf16.msra.mxu0 0
        %515 = vmatprep.subr.bf16.mxu0 0
        %516 = vmatpush2.bf16.msra.mxu0 0
        %517 = vmatprep.subr.bf16.mxu0 0
        %518 = vmatpush2.bf16.msra.mxu0 0
        %519 = vmatprep.subr.bf16.mxu0 0
        %520 = vmatpush2.bf16.msra.mxu0 0
        %521 = vmatprep.mubr.bf16.mxu0 0
        %522 = vmatmul.mubr.bf16.gmra.mxu0 %v425
        %v523 = vpop.f32.mrf.mxu0
        %v524 = vadd.f32 0.0, %v523
        %v525 = vpop.f32.mrf.mxu0
        %v526 = vpop.f32.mrf.mxu0
        %v527 = vadd.f32 0.0, %v526
        %v528 = vpop.f32.mrf.mxu0
        %529 = vmatprep.mubr.bf16.mxu0 0
        %530 = vmatmul.mubr.bf16.gmra.mxu0 %v426
        %v531 = vpop.f32.mrf.mxu0
        %v532 = vadd.f32 0.0, %v531
        %v533 = vpop.f32.mrf.mxu0
        %v534 = vpop.f32.mrf.mxu0
        %v535 = vadd.f32 0.0, %v534
        %v536 = vpop.f32.mrf.mxu0
        %537 = vmatprep.mubr.bf16.mxu0 0
        %538 = vmatmul.mubr.bf16.gmra.mxu0 %v427
        %v539 = vpop.f32.mrf.mxu0
        %v540 = vadd.f32 0.0, %v539
        %v541 = vpop.f32.mrf.mxu0
        %v542 = vpop.f32.mrf.mxu0
        %v543 = vadd.f32 0.0, %v542
        %v544 = vpop.f32.mrf.mxu0
        %545 = vmatprep.mubr.bf16.mxu0 0
        %546 = vmatmul.mubr.bf16.gmra.mxu0 %v428
        %v547 = vpop.f32.mrf.mxu0
        %v548 = vadd.f32 0.0, %v547
        %v549 = vpop.f32.mrf.mxu0
        %v550 = vpop.f32.mrf.mxu0
        %v551 = vadd.f32 0.0, %v550
        %v552 = vpop.f32.mrf.mxu0
        %553 = vmatprep.mubr.bf16.mxu0 0
        %554 = vmatmul.mubr.bf16.gmra.mxu0 %v429
        %v555 = vpop.f32.mrf.mxu0
        %v556 = vadd.f32 0.0, %v555
        %v557 = vpop.f32.mrf.mxu0
        %v558 = vpop.f32.mrf.mxu0
        %v559 = vadd.f32 0.0, %v558
        %v560 = vpop.f32.mrf.mxu0
        %561 = vmatprep.mubr.bf16.mxu0 0
        %562 = vmatmul.mubr.bf16.gmra.mxu0 %v430
        %v563 = vpop.f32.mrf.mxu0
        %v564 = vadd.f32 0.0, %v563
        %v565 = vpop.f32.mrf.mxu0
        %v566 = vpop.f32.mrf.mxu0
        %v567 = vadd.f32 0.0, %v566
        %v568 = vpop.f32.mrf.mxu0
        %569 = vmatprep.mubr.bf16.mxu0 0
        %570 = vmatmul.mubr.bf16.gmra.mxu0 %v431
        %v571 = vpop.f32.mrf.mxu0
        %v572 = vadd.f32 0.0, %v571
        %v573 = vpop.f32.mrf.mxu0
        %v574 = vpop.f32.mrf.mxu0
        %v575 = vadd.f32 0.0, %v574
        %v576 = vpop.f32.mrf.mxu0
        %577 = vmatprep.mubr.bf16.mxu0 0
        %578 = vmatmul.mubr.bf16.gmra.mxu0 %v432
        %v579 = vpop.f32.mrf.mxu0
        %v580 = vadd.f32 0.0, %v579
        %v581 = vpop.f32.mrf.mxu0
        %v582 = vpop.f32.mrf.mxu0
        %v583 = vadd.f32 0.0, %v582
        %v584 = vpop.f32.mrf.mxu0
        %585 = vdwg.mxu0
        %v586 = vpack.c.bf16 %v527, %v524
        %v587 = vpack.c.bf16 %v535, %v532
        %v588 = vpack.c.bf16 %v543, %v540
        %v589 = vpack.c.bf16 %v551, %v548
        %v590 = vpack.c.bf16 %v559, %v556
        %v591 = vpack.c.bf16 %v567, %v564
        %v592 = vpack.c.bf16 %v575, %v572
        %v593 = vpack.c.bf16 %v583, %v580
        %v594 = vld [vmem:[#allocation8] sm:$0xf]
        %v595 = vld [vmem:[#allocation8 + $0x4] sm:$0xf]
        %v596 = vld [vmem:[#allocation8 + $0x8] sm:$0xf]
        %v597 = vld [vmem:[#allocation8 + $0xc] sm:$0xf]
        %v598 = vld [vmem:[#allocation8 + $0x10] sm:$0xf]
        %v599 = vld [vmem:[#allocation8 + $0x14] sm:$0xf]
        %v600 = vld [vmem:[#allocation8 + $0x18] sm:$0xf]
        %v601 = vld [vmem:[#allocation8 + $0x1c] sm:$0xf]
        %v602 = vld [vmem:[#allocation8 + $0x20] sm:$0xf]
        %v603 = vld [vmem:[#allocation8 + $0x24] sm:$0xf]
        %v604 = vld [vmem:[#allocation8 + $0x28] sm:$0xf]
        %v605 = vld [vmem:[#allocation8 + $0x2c] sm:$0xf]
        %v606 = vld [vmem:[#allocation8 + $0x30] sm:$0xf]
        %v607 = vld [vmem:[#allocation8 + $0x34] sm:$0xf]
        %v608 = vld [vmem:[#allocation8 + $0x38] sm:$0xf]
        %v609 = vld [vmem:[#allocation8 + $0x3c] sm:$0xf]
        %v610 = vld [vmem:[%s4] sm:$0x1]
        %v611 = vlaneseq
        %v612 = vshrl.u32 %v611, 7
        %v613 = vsub.s32 0, %v612
        %v614 = vrot.slane %v610, %v613
        %v631 = vunpack.c.l.b16 %v594
        %v632 = vunpack.c.l.b16 %v595
        %v633 = vunpack.c.l.b16 %v596
        %v634 = vunpack.c.l.b16 %v597
        %v635 = vunpack.c.l.b16 %v598
        %v636 = vunpack.c.l.b16 %v599
        %v637 = vunpack.c.l.b16 %v600
        %v638 = vunpack.c.l.b16 %v601
        %v639 = vunpack.c.l.b16 %v602
        %v640 = vunpack.c.l.b16 %v603
        %v641 = vunpack.c.l.b16 %v604
        %v642 = vunpack.c.l.b16 %v605
        %v643 = vunpack.c.l.b16 %v606
        %v644 = vunpack.c.l.b16 %v607
        %v645 = vunpack.c.l.b16 %v608
        %v646 = vunpack.c.l.b16 %v609
        %v647 = vpack.c.b16 %v632, %v631
        %v648 = vpack.c.b16 %v634, %v633
        %v649 = vpack.c.b16 %v636, %v635
        %v650 = vpack.c.b16 %v638, %v637
        %v651 = vpack.c.b16 %v640, %v639
        %v652 = vpack.c.b16 %v642, %v641
        %v653 = vpack.c.b16 %v644, %v643
        %v654 = vpack.c.b16 %v646, %v645
        %663 = vmatprep.subr.bf16.mxu0 0
        %664 = vmatpush1.bf16.msra.mxu0 %v654
        %665 = vmatprep.subr.bf16.mxu0 0
        %666 = vmatpush1.bf16.msra.mxu0 %v653
        %667 = vmatprep.subr.bf16.mxu0 0
        %668 = vmatpush1.bf16.msra.mxu0 %v652
        %669 = vmatprep.subr.bf16.mxu0 0
        %670 = vmatpush1.bf16.msra.mxu0 %v651
        %671 = vmatprep.subr.bf16.mxu0 0
        %672 = vmatpush1.bf16.msra.mxu0 %v650
        %673 = vmatprep.subr.bf16.mxu0 0
        %674 = vmatpush1.bf16.msra.mxu0 %v649
        %675 = vmatprep.subr.bf16.mxu0 0
        %676 = vmatpush1.bf16.msra.mxu0 %v648
        %677 = vmatprep.subr.bf16.mxu0 0
        %678 = vmatpush1.bf16.msra.mxu0 %v647
        %679 = vmatprep.subr.bf16.mxu0 0
        %680 = vmatpush2.bf16.msra.mxu0 0
        %681 = vmatprep.subr.bf16.mxu0 0
        %682 = vmatpush2.bf16.msra.mxu0 0
        %683 = vmatprep.subr.bf16.mxu0 0
        %684 = vmatpush2.bf16.msra.mxu0 0
        %685 = vmatprep.subr.bf16.mxu0 0
        %686 = vmatpush2.bf16.msra.mxu0 0
        %687 = vmatprep.subr.bf16.mxu0 0
        %688 = vmatpush2.bf16.msra.mxu0 0
        %689 = vmatprep.subr.bf16.mxu0 0
        %690 = vmatpush2.bf16.msra.mxu0 0
        %691 = vmatprep.subr.bf16.mxu0 0
        %692 = vmatpush2.bf16.msra.mxu0 0
        %693 = vmatprep.subr.bf16.mxu0 0
        %694 = vmatpush2.bf16.msra.mxu0 0
        %695 = vmatprep.mubr.bf16.mxu0 0
        %696 = vmatmul.mubr.bf16.gmra.mxu0 %v586
        %v697 = vpop.f32.mrf.mxu0
        %v698 = vadd.f32 %v614, %v697
        %v699 = vpop.f32.mrf.mxu0
        %v700 = vpop.f32.mrf.mxu0
        %v701 = vadd.f32 %v614, %v700
        %v702 = vpop.f32.mrf.mxu0
        %703 = vmatprep.mubr.bf16.mxu0 0
        %704 = vmatmul.mubr.bf16.gmra.mxu0 %v587
        %v705 = vpop.f32.mrf.mxu0
        %v706 = vadd.f32 %v614, %v705
        %v707 = vpop.f32.mrf.mxu0
        %v708 = vpop.f32.mrf.mxu0
        %v709 = vadd.f32 %v614, %v708
        %v710 = vpop.f32.mrf.mxu0
        %711 = vmatprep.mubr.bf16.mxu0 0
        %712 = vmatmul.mubr.bf16.gmra.mxu0 %v588
        %v713 = vpop.f32.mrf.mxu0
        %v714 = vadd.f32 %v614, %v713
        %v715 = vpop.f32.mrf.mxu0
        %v716 = vpop.f32.mrf.mxu0
        %v717 = vadd.f32 %v614, %v716
        %v718 = vpop.f32.mrf.mxu0
        %719 = vmatprep.mubr.bf16.mxu0 0
        %720 = vmatmul.mubr.bf16.gmra.mxu0 %v589
        %v721 = vpop.f32.mrf.mxu0
        %v722 = vadd.f32 %v614, %v721
        %v723 = vpop.f32.mrf.mxu0
        %v724 = vpop.f32.mrf.mxu0
        %v725 = vadd.f32 %v614, %v724
        %v726 = vpop.f32.mrf.mxu0
        %727 = vmatprep.mubr.bf16.mxu0 0
        %728 = vmatmul.mubr.bf16.gmra.mxu0 %v590
        %v729 = vpop.f32.mrf.mxu0
        %v730 = vadd.f32 %v614, %v729
        %v731 = vpop.f32.mrf.mxu0
        %v732 = vpop.f32.mrf.mxu0
        %v733 = vadd.f32 %v614, %v732
        %v734 = vpop.f32.mrf.mxu0
        %735 = vmatprep.mubr.bf16.mxu0 0
        %736 = vmatmul.mubr.bf16.gmra.mxu0 %v591
        %v737 = vpop.f32.mrf.mxu0
        %v738 = vadd.f32 %v614, %v737
        %v739 = vpop.f32.mrf.mxu0
        %v740 = vpop.f32.mrf.mxu0
        %v741 = vadd.f32 %v614, %v740
        %v742 = vpop.f32.mrf.mxu0
        %743 = vmatprep.mubr.bf16.mxu0 0
        %744 = vmatmul.mubr.bf16.gmra.mxu0 %v592
        %v745 = vpop.f32.mrf.mxu0
        %v746 = vadd.f32 %v614, %v745
        %v747 = vpop.f32.mrf.mxu0
        %v748 = vpop.f32.mrf.mxu0
        %v749 = vadd.f32 %v614, %v748
        %v750 = vpop.f32.mrf.mxu0
        %751 = vmatprep.mubr.bf16.mxu0 0
        %752 = vmatmul.mubr.bf16.gmra.mxu0 %v593
        %v753 = vpop.f32.mrf.mxu0
        %v754 = vadd.f32 %v614, %v753
        %v755 = vpop.f32.mrf.mxu0
        %v756 = vpop.f32.mrf.mxu0
        %v757 = vadd.f32 %v614, %v756
        %v758 = vpop.f32.mrf.mxu0
        %759 = vdwg.mxu0
        %v760 = vmax.f32 %v698, 0.0
        %v761 = vmax.f32 %v701, 0.0
        %v762 = vmax.f32 %v706, 0.0
        %v763 = vmax.f32 %v709, 0.0
        %v764 = vmax.f32 %v714, 0.0
        %v765 = vmax.f32 %v717, 0.0
        %v766 = vmax.f32 %v722, 0.0
        %v767 = vmax.f32 %v725, 0.0
        %v768 = vmax.f32 %v730, 0.0
        %v769 = vmax.f32 %v733, 0.0
        %v770 = vmax.f32 %v738, 0.0
        %v771 = vmax.f32 %v741, 0.0
        %v772 = vmax.f32 %v746, 0.0
        %v773 = vmax.f32 %v749, 0.0
        %v774 = vmax.f32 %v754, 0.0
        %v775 = vmax.f32 %v757, 0.0
        %v776 = vpack.c.bf16 %v761, %v760
        %v777 = vpack.c.bf16 %v763, %v762
        %v778 = vpack.c.bf16 %v765, %v764
        %v779 = vpack.c.bf16 %v767, %v766
        %v780 = vpack.c.bf16 %v769, %v768
        %v781 = vpack.c.bf16 %v771, %v770
        %v782 = vpack.c.bf16 %v773, %v772
        %v783 = vpack.c.bf16 %v775, %v774
        %s784 = scalar_lea.vmem [#allocation8], 64
        %v785 = vld [vmem:[%s784] sm:$0xf]
        %v786 = vld [vmem:[%s784 + $0x4] sm:$0xf]
        %v787 = vld [vmem:[%s784 + $0x8] sm:$0xf]
        %v788 = vld [vmem:[%s784 + $0xc] sm:$0xf]
        %v789 = vld [vmem:[%s784 + $0x10] sm:$0xf]
        %v790 = vld [vmem:[%s784 + $0x14] sm:$0xf]
        %v791 = vld [vmem:[%s784 + $0x18] sm:$0xf]
        %v792 = vld [vmem:[%s784 + $0x1c] sm:$0xf]
        %v793 = vld [vmem:[%s784 + $0x20] sm:$0xf]
        %v794 = vld [vmem:[%s784 + $0x24] sm:$0xf]
        %v795 = vld [vmem:[%s784 + $0x28] sm:$0xf]
        %v796 = vld [vmem:[%s784 + $0x2c] sm:$0xf]
        %v797 = vld [vmem:[%s784 + $0x30] sm:$0xf]
        %v798 = vld [vmem:[%s784 + $0x34] sm:$0xf]
        %v799 = vld [vmem:[%s784 + $0x38] sm:$0xf]
        %v800 = vld [vmem:[%s784 + $0x3c] sm:$0xf]
        %v817 = vunpack.c.l.b16 %v785
        %v818 = vunpack.c.l.b16 %v786
        %v819 = vunpack.c.l.b16 %v787
        %v820 = vunpack.c.l.b16 %v788
        %v821 = vunpack.c.l.b16 %v789
        %v822 = vunpack.c.l.b16 %v790
        %v823 = vunpack.c.l.b16 %v791
        %v824 = vunpack.c.l.b16 %v792
        %v825 = vunpack.c.l.b16 %v793
        %v826 = vunpack.c.l.b16 %v794
        %v827 = vunpack.c.l.b16 %v795
        %v828 = vunpack.c.l.b16 %v796
        %v829 = vunpack.c.l.b16 %v797
        %v830 = vunpack.c.l.b16 %v798
        %v831 = vunpack.c.l.b16 %v799
        %v832 = vunpack.c.l.b16 %v800
        %v833 = vpack.c.b16 %v818, %v817
        %v834 = vpack.c.b16 %v820, %v819
        %v835 = vpack.c.b16 %v822, %v821
        %v836 = vpack.c.b16 %v824, %v823
        %v837 = vpack.c.b16 %v826, %v825
        %v838 = vpack.c.b16 %v828, %v827
        %v839 = vpack.c.b16 %v830, %v829
        %v840 = vpack.c.b16 %v832, %v831
        %849 = vmatprep.subr.bf16.mxu0 0
        %850 = vmatpush1.bf16.msra.mxu0 %v840
        %851 = vmatprep.subr.bf16.mxu0 0
        %852 = vmatpush1.bf16.msra.mxu0 %v839
        %853 = vmatprep.subr.bf16.mxu0 0
        %854 = vmatpush1.bf16.msra.mxu0 %v838
        %855 = vmatprep.subr.bf16.mxu0 0
        %856 = vmatpush1.bf16.msra.mxu0 %v837
        %857 = vmatprep.subr.bf16.mxu0 0
        %858 = vmatpush1.bf16.msra.mxu0 %v836
        %859 = vmatprep.subr.bf16.mxu0 0
        %860 = vmatpush1.bf16.msra.mxu0 %v835
        %861 = vmatprep.subr.bf16.mxu0 0
        %862 = vmatpush1.bf16.msra.mxu0 %v834
        %863 = vmatprep.subr.bf16.mxu0 0
        %864 = vmatpush1.bf16.msra.mxu0 %v833
        %865 = vmatprep.subr.bf16.mxu0 0
        %866 = vmatpush2.bf16.msra.mxu0 0
        %867 = vmatprep.subr.bf16.mxu0 0
        %868 = vmatpush2.bf16.msra.mxu0 0
        %869 = vmatprep.subr.bf16.mxu0 0
        %870 = vmatpush2.bf16.msra.mxu0 0
        %871 = vmatprep.subr.bf16.mxu0 0
        %872 = vmatpush2.bf16.msra.mxu0 0
        %873 = vmatprep.subr.bf16.mxu0 0
        %874 = vmatpush2.bf16.msra.mxu0 0
        %875 = vmatprep.subr.bf16.mxu0 0
        %876 = vmatpush2.bf16.msra.mxu0 0
        %877 = vmatprep.subr.bf16.mxu0 0
        %878 = vmatpush2.bf16.msra.mxu0 0
        %879 = vmatprep.subr.bf16.mxu0 0
        %880 = vmatpush2.bf16.msra.mxu0 0
        %881 = vmatprep.mubr.bf16.mxu0 0
        %882 = vmatmul.mubr.bf16.gmra.mxu0 %v776
        %v883 = vpop.f32.mrf.mxu0
        %v884 = vadd.f32 0.0, %v883
        %v885 = vpop.f32.mrf.mxu0
        %v886 = vpop.f32.mrf.mxu0
        %v887 = vadd.f32 0.0, %v886
        %v888 = vpop.f32.mrf.mxu0
        %889 = vmatprep.mubr.bf16.mxu0 0
        %890 = vmatmul.mubr.bf16.gmra.mxu0 %v777
        %v891 = vpop.f32.mrf.mxu0
        %v892 = vadd.f32 0.0, %v891
        %v893 = vpop.f32.mrf.mxu0
        %v894 = vpop.f32.mrf.mxu0
        %v895 = vadd.f32 0.0, %v894
        %v896 = vpop.f32.mrf.mxu0
        %897 = vmatprep.mubr.bf16.mxu0 0
        %898 = vmatmul.mubr.bf16.gmra.mxu0 %v778
        %v899 = vpop.f32.mrf.mxu0
        %v900 = vadd.f32 0.0, %v899
        %v901 = vpop.f32.mrf.mxu0
        %v902 = vpop.f32.mrf.mxu0
        %v903 = vadd.f32 0.0, %v902
        %v904 = vpop.f32.mrf.mxu0
        %905 = vmatprep.mubr.bf16.mxu0 0
        %906 = vmatmul.mubr.bf16.gmra.mxu0 %v779
        %v907 = vpop.f32.mrf.mxu0
        %v908 = vadd.f32 0.0, %v907
        %v909 = vpop.f32.mrf.mxu0
        %v910 = vpop.f32.mrf.mxu0
        %v911 = vadd.f32 0.0, %v910
        %v912 = vpop.f32.mrf.mxu0
        %913 = vmatprep.mubr.bf16.mxu0 0
        %914 = vmatmul.mubr.bf16.gmra.mxu0 %v780
        %v915 = vpop.f32.mrf.mxu0
        %v916 = vadd.f32 0.0, %v915
        %v917 = vpop.f32.mrf.mxu0
        %v918 = vpop.f32.mrf.mxu0
        %v919 = vadd.f32 0.0, %v918
        %v920 = vpop.f32.mrf.mxu0
        %921 = vmatprep.mubr.bf16.mxu0 0
        %922 = vmatmul.mubr.bf16.gmra.mxu0 %v781
        %v923 = vpop.f32.mrf.mxu0
        %v924 = vadd.f32 0.0, %v923
        %v925 = vpop.f32.mrf.mxu0
        %v926 = vpop.f32.mrf.mxu0
        %v927 = vadd.f32 0.0, %v926
        %v928 = vpop.f32.mrf.mxu0
        %929 = vmatprep.mubr.bf16.mxu0 0
        %930 = vmatmul.mubr.bf16.gmra.mxu0 %v782
        %v931 = vpop.f32.mrf.mxu0
        %v932 = vadd.f32 0.0, %v931
        %v933 = vpop.f32.mrf.mxu0
        %v934 = vpop.f32.mrf.mxu0
        %v935 = vadd.f32 0.0, %v934
        %v936 = vpop.f32.mrf.mxu0
        %937 = vmatprep.mubr.bf16.mxu0 0
        %938 = vmatmul.mubr.bf16.gmra.mxu0 %v783
        %v939 = vpop.f32.mrf.mxu0
        %v940 = vadd.f32 0.0, %v939
        %v941 = vpop.f32.mrf.mxu0
        %v942 = vpop.f32.mrf.mxu0
        %v943 = vadd.f32 0.0, %v942
        %v944 = vpop.f32.mrf.mxu0
        %945 = vdwg.mxu0
        %v946 = vpack.c.bf16 %v887, %v884
        %v947 = vpack.c.bf16 %v895, %v892
        %v948 = vpack.c.bf16 %v903, %v900
        %v949 = vpack.c.bf16 %v911, %v908
        %v950 = vpack.c.bf16 %v919, %v916
        %v951 = vpack.c.bf16 %v927, %v924
        %v952 = vpack.c.bf16 %v935, %v932
        %v953 = vpack.c.bf16 %v943, %v940
        %v954 = vld [vmem:[%s4 + $0x1] sm:$0x1]
        %v955 = vlaneseq
        %v956 = vshrl.u32 %v955, 7
        %v957 = vsub.s32 0, %v956
        %v958 = vrot.slane %v954, %v957
        %959 = vmatprep.subr.bf16.mxu0 0
        %960 = vmatpush1.bf16.msra.mxu0 %v953
        %961 = vmatprep.subr.bf16.mxu0 0
        %962 = vmatpush1.bf16.msra.mxu0 %v952
        %963 = vmatprep.subr.bf16.mxu0 0
        %964 = vmatpush1.bf16.msra.mxu0 %v951
        %965 = vmatprep.subr.bf16.mxu0 0
        %966 = vmatpush1.bf16.msra.mxu0 %v950
        %967 = vmatprep.subr.bf16.mxu0 0
        %968 = vmatpush1.bf16.msra.mxu0 %v949
        %969 = vmatprep.subr.bf16.mxu0 0
        %970 = vmatpush1.bf16.msra.mxu0 %v948
        %971 = vmatprep.subr.bf16.mxu0 0
        %972 = vmatpush1.bf16.msra.mxu0 %v947
        %973 = vmatprep.subr.bf16.mxu0 0
        %974 = vmatpush1.bf16.msra.mxu0 %v946
        %975 = vmatprep.subr.bf16.mxu0 0
        %976 = vmatpush2.bf16.msra.mxu0 0
        %977 = vmatprep.subr.bf16.mxu0 0
        %978 = vmatpush2.bf16.msra.mxu0 0
        %979 = vmatprep.subr.bf16.mxu0 0
        %980 = vmatpush2.bf16.msra.mxu0 0
        %981 = vmatprep.subr.bf16.mxu0 0
        %982 = vmatpush2.bf16.msra.mxu0 0
        %983 = vmatprep.subr.bf16.mxu0 0
        %984 = vmatpush2.bf16.msra.mxu0 0
        %985 = vmatprep.subr.bf16.mxu0 0
        %986 = vmatpush2.bf16.msra.mxu0 0
        %987 = vmatprep.subr.bf16.mxu0 0
        %988 = vmatpush2.bf16.msra.mxu0 0
        %989 = vmatprep.subr.bf16.mxu0 0
        %990 = vmatpush2.bf16.msra.mxu0 0
        %991 = vmatprep.mubr.bf16.mxu0 0
        %992 = vmatmul.mubr.bf16.gmra.mxu0 %v425
        %v993 = vpop.f32.mrf.mxu0
        %v994 = vadd.f32 %v958, %v993
        %v995 = vpop.f32.mrf.mxu0
        %v996 = vpop.f32.mrf.mxu0
        %v997 = vadd.f32 %v958, %v996
        %v998 = vpop.f32.mrf.mxu0
        %999 = vmatprep.mubr.bf16.mxu0 0
        %1000 = vmatmul.mubr.bf16.gmra.mxu0 %v426
        %v1001 = vpop.f32.mrf.mxu0
        %v1002 = vadd.f32 %v958, %v1001
        %v1003 = vpop.f32.mrf.mxu0
        %v1004 = vpop.f32.mrf.mxu0
        %v1005 = vadd.f32 %v958, %v1004
        %v1006 = vpop.f32.mrf.mxu0
        %1007 = vmatprep.mubr.bf16.mxu0 0
        %1008 = vmatmul.mubr.bf16.gmra.mxu0 %v427
        %v1009 = vpop.f32.mrf.mxu0
        %v1010 = vadd.f32 %v958, %v1009
        %v1011 = vpop.f32.mrf.mxu0
        %v1012 = vpop.f32.mrf.mxu0
        %v1013 = vadd.f32 %v958, %v1012
        %v1014 = vpop.f32.mrf.mxu0
        %1015 = vmatprep.mubr.bf16.mxu0 0
        %1016 = vmatmul.mubr.bf16.gmra.mxu0 %v428
        %v1017 = vpop.f32.mrf.mxu0
        %v1018 = vadd.f32 %v958, %v1017
        %v1019 = vpop.f32.mrf.mxu0
        %v1020 = vpop.f32.mrf.mxu0
        %v1021 = vadd.f32 %v958, %v1020
        %v1022 = vpop.f32.mrf.mxu0
        %1023 = vmatprep.mubr.bf16.mxu0 0
        %1024 = vmatmul.mubr.bf16.gmra.mxu0 %v429
        %v1025 = vpop.f32.mrf.mxu0
        %v1026 = vadd.f32 %v958, %v1025
        %v1027 = vpop.f32.mrf.mxu0
        %v1028 = vpop.f32.mrf.mxu0
        %v1029 = vadd.f32 %v958, %v1028
        %v1030 = vpop.f32.mrf.mxu0
        %1031 = vmatprep.mubr.bf16.mxu0 0
        %1032 = vmatmul.mubr.bf16.gmra.mxu0 %v430
        %v1033 = vpop.f32.mrf.mxu0
        %v1034 = vadd.f32 %v958, %v1033
        %v1035 = vpop.f32.mrf.mxu0
        %v1036 = vpop.f32.mrf.mxu0
        %v1037 = vadd.f32 %v958, %v1036
        %v1038 = vpop.f32.mrf.mxu0
        %1039 = vmatprep.mubr.bf16.mxu0 0
        %1040 = vmatmul.mubr.bf16.gmra.mxu0 %v431
        %v1041 = vpop.f32.mrf.mxu0
        %v1042 = vadd.f32 %v958, %v1041
        %v1043 = vpop.f32.mrf.mxu0
        %v1044 = vpop.f32.mrf.mxu0
        %v1045 = vadd.f32 %v958, %v1044
        %v1046 = vpop.f32.mrf.mxu0
        %1047 = vmatprep.mubr.bf16.mxu0 0
        %1048 = vmatmul.mubr.bf16.gmra.mxu0 %v432
        %v1049 = vpop.f32.mrf.mxu0
        %v1050 = vadd.f32 %v958, %v1049
        %v1051 = vpop.f32.mrf.mxu0
        %v1052 = vpop.f32.mrf.mxu0
        %v1053 = vadd.f32 %v958, %v1052
        %v1054 = vpop.f32.mrf.mxu0
        %1055 = vdwg.mxu0
        %v1056 = vmax.f32 %v994, 0.0
        %v1057 = vmax.f32 %v997, 0.0
        %v1058 = vmax.f32 %v1002, 0.0
        %v1059 = vmax.f32 %v1005, 0.0
        %v1060 = vmax.f32 %v1010, 0.0
        %v1061 = vmax.f32 %v1013, 0.0
        %v1062 = vmax.f32 %v1018, 0.0
        %v1063 = vmax.f32 %v1021, 0.0
        %v1064 = vmax.f32 %v1026, 0.0
        %v1065 = vmax.f32 %v1029, 0.0
        %v1066 = vmax.f32 %v1034, 0.0
        %v1067 = vmax.f32 %v1037, 0.0
        %v1068 = vmax.f32 %v1042, 0.0
        %v1069 = vmax.f32 %v1045, 0.0
        %v1070 = vmax.f32 %v1050, 0.0
        %v1071 = vmax.f32 %v1053, 0.0
        %v1072 = vpack.c.bf16 %v1057, %v1056
        %v1073 = vpack.c.bf16 %v1059, %v1058
        %v1074 = vpack.c.bf16 %v1061, %v1060
        %v1075 = vpack.c.bf16 %v1063, %v1062
        %v1076 = vpack.c.bf16 %v1065, %v1064
        %v1077 = vpack.c.bf16 %v1067, %v1066
        %v1078 = vpack.c.bf16 %v1069, %v1068
        %v1079 = vpack.c.bf16 %v1071, %v1070
        %s1080 = scalar_lea.vmem [#allocation8], 128
        %v1081 = vld [vmem:[%s1080] sm:$0xf]
        %v1082 = vld [vmem:[%s1080 + $0x4] sm:$0xf]
        %v1083 = vld [vmem:[%s1080 + $0x8] sm:$0xf]
        %v1084 = vld [vmem:[%s1080 + $0xc] sm:$0xf]
        %v1085 = vld [vmem:[%s1080 + $0x10] sm:$0xf]
        %v1086 = vld [vmem:[%s1080 + $0x14] sm:$0xf]
        %v1087 = vld [vmem:[%s1080 + $0x18] sm:$0xf]
        %v1088 = vld [vmem:[%s1080 + $0x1c] sm:$0xf]
        %v1089 = vld [vmem:[%s1080 + $0x20] sm:$0xf]
        %v1090 = vld [vmem:[%s1080 + $0x24] sm:$0xf]
        %v1091 = vld [vmem:[%s1080 + $0x28] sm:$0xf]
        %v1092 = vld [vmem:[%s1080 + $0x2c] sm:$0xf]
        %v1093 = vld [vmem:[%s1080 + $0x30] sm:$0xf]
        %v1094 = vld [vmem:[%s1080 + $0x34] sm:$0xf]
        %v1095 = vld [vmem:[%s1080 + $0x38] sm:$0xf]
        %v1096 = vld [vmem:[%s1080 + $0x3c] sm:$0xf]
        %v1113 = vunpack.c.l.b16 %v1081
        %v1114 = vunpack.c.l.b16 %v1082
        %v1115 = vunpack.c.l.b16 %v1083
        %v1116 = vunpack.c.l.b16 %v1084
        %v1117 = vunpack.c.l.b16 %v1085
        %v1118 = vunpack.c.l.b16 %v1086
        %v1119 = vunpack.c.l.b16 %v1087
        %v1120 = vunpack.c.l.b16 %v1088
        %v1121 = vunpack.c.l.b16 %v1089
        %v1122 = vunpack.c.l.b16 %v1090
        %v1123 = vunpack.c.l.b16 %v1091
        %v1124 = vunpack.c.l.b16 %v1092
        %v1125 = vunpack.c.l.b16 %v1093
        %v1126 = vunpack.c.l.b16 %v1094
        %v1127 = vunpack.c.l.b16 %v1095
        %v1128 = vunpack.c.l.b16 %v1096
        %v1129 = vpack.c.b16 %v1114, %v1113
        %v1130 = vpack.c.b16 %v1116, %v1115
        %v1131 = vpack.c.b16 %v1118, %v1117
        %v1132 = vpack.c.b16 %v1120, %v1119
        %v1133 = vpack.c.b16 %v1122, %v1121
        %v1134 = vpack.c.b16 %v1124, %v1123
        %v1135 = vpack.c.b16 %v1126, %v1125
        %v1136 = vpack.c.b16 %v1128, %v1127
        %1145 = vmatprep.subr.bf16.mxu0 0
        %1146 = vmatpush1.bf16.msra.mxu0 %v1136
        %1147 = vmatprep.subr.bf16.mxu0 0
        %1148 = vmatpush1.bf16.msra.mxu0 %v1135
        %1149 = vmatprep.subr.bf16.mxu0 0
        %1150 = vmatpush1.bf16.msra.mxu0 %v1134
        %1151 = vmatprep.subr.bf16.mxu0 0
        %1152 = vmatpush1.bf16.msra.mxu0 %v1133
        %1153 = vmatprep.subr.bf16.mxu0 0
        %1154 = vmatpush1.bf16.msra.mxu0 %v1132
        %1155 = vmatprep.subr.bf16.mxu0 0
        %1156 = vmatpush1.bf16.msra.mxu0 %v1131
        %1157 = vmatprep.subr.bf16.mxu0 0
        %1158 = vmatpush1.bf16.msra.mxu0 %v1130
        %1159 = vmatprep.subr.bf16.mxu0 0
        %1160 = vmatpush1.bf16.msra.mxu0 %v1129
        %1161 = vmatprep.subr.bf16.mxu0 0
        %1162 = vmatpush2.bf16.msra.mxu0 0
        %1163 = vmatprep.subr.bf16.mxu0 0
        %1164 = vmatpush2.bf16.msra.mxu0 0
        %1165 = vmatprep.subr.bf16.mxu0 0
        %1166 = vmatpush2.bf16.msra.mxu0 0
        %1167 = vmatprep.subr.bf16.mxu0 0
        %1168 = vmatpush2.bf16.msra.mxu0 0
        %1169 = vmatprep.subr.bf16.mxu0 0
        %1170 = vmatpush2.bf16.msra.mxu0 0
        %1171 = vmatprep.subr.bf16.mxu0 0
        %1172 = vmatpush2.bf16.msra.mxu0 0
        %1173 = vmatprep.subr.bf16.mxu0 0
        %1174 = vmatpush2.bf16.msra.mxu0 0
        %1175 = vmatprep.subr.bf16.mxu0 0
        %1176 = vmatpush2.bf16.msra.mxu0 0
        %1177 = vmatprep.mubr.bf16.mxu0 0
        %1178 = vmatmul.mubr.bf16.gmra.mxu0 %v1072
        %v1179 = vpop.f32.mrf.mxu0
        %v1180 = vadd.f32 0.0, %v1179
        %v1181 = vpop.f32.mrf.mxu0
        %v1182 = vpop.f32.mrf.mxu0
        %v1183 = vadd.f32 0.0, %v1182
        %v1184 = vpop.f32.mrf.mxu0
        %1185 = vmatprep.mubr.bf16.mxu0 0
        %1186 = vmatmul.mubr.bf16.gmra.mxu0 %v1073
        %v1187 = vpop.f32.mrf.mxu0
        %v1188 = vadd.f32 0.0, %v1187
        %v1189 = vpop.f32.mrf.mxu0
        %v1190 = vpop.f32.mrf.mxu0
        %v1191 = vadd.f32 0.0, %v1190
        %v1192 = vpop.f32.mrf.mxu0
        %1193 = vmatprep.mubr.bf16.mxu0 0
        %1194 = vmatmul.mubr.bf16.gmra.mxu0 %v1074
        %v1195 = vpop.f32.mrf.mxu0
        %v1196 = vadd.f32 0.0, %v1195
        %v1197 = vpop.f32.mrf.mxu0
        %v1198 = vpop.f32.mrf.mxu0
        %v1199 = vadd.f32 0.0, %v1198
        %v1200 = vpop.f32.mrf.mxu0
        %1201 = vmatprep.mubr.bf16.mxu0 0
        %1202 = vmatmul.mubr.bf16.gmra.mxu0 %v1075
        %v1203 = vpop.f32.mrf.mxu0
        %v1204 = vadd.f32 0.0, %v1203
        %v1205 = vpop.f32.mrf.mxu0
        %v1206 = vpop.f32.mrf.mxu0
        %v1207 = vadd.f32 0.0, %v1206
        %v1208 = vpop.f32.mrf.mxu0
        %1209 = vmatprep.mubr.bf16.mxu0 0
        %1210 = vmatmul.mubr.bf16.gmra.mxu0 %v1076
        %v1211 = vpop.f32.mrf.mxu0
        %v1212 = vadd.f32 0.0, %v1211
        %v1213 = vpop.f32.mrf.mxu0
        %v1214 = vpop.f32.mrf.mxu0
        %v1215 = vadd.f32 0.0, %v1214
        %v1216 = vpop.f32.mrf.mxu0
        %1217 = vmatprep.mubr.bf16.mxu0 0
        %1218 = vmatmul.mubr.bf16.gmra.mxu0 %v1077
        %v1219 = vpop.f32.mrf.mxu0
        %v1220 = vadd.f32 0.0, %v1219
        %v1221 = vpop.f32.mrf.mxu0
        %v1222 = vpop.f32.mrf.mxu0
        %v1223 = vadd.f32 0.0, %v1222
        %v1224 = vpop.f32.mrf.mxu0
        %1225 = vmatprep.mubr.bf16.mxu0 0
        %1226 = vmatmul.mubr.bf16.gmra.mxu0 %v1078
        %v1227 = vpop.f32.mrf.mxu0
        %v1228 = vadd.f32 0.0, %v1227
        %v1229 = vpop.f32.mrf.mxu0
        %v1230 = vpop.f32.mrf.mxu0
        %v1231 = vadd.f32 0.0, %v1230
        %v1232 = vpop.f32.mrf.mxu0
        %1233 = vmatprep.mubr.bf16.mxu0 0
        %1234 = vmatmul.mubr.bf16.gmra.mxu0 %v1079
        %v1235 = vpop.f32.mrf.mxu0
        %v1236 = vadd.f32 0.0, %v1235
        %v1237 = vpop.f32.mrf.mxu0
        %v1238 = vpop.f32.mrf.mxu0
        %v1239 = vadd.f32 0.0, %v1238
        %v1240 = vpop.f32.mrf.mxu0
        %1241 = vdwg.mxu0
        %v1242 = vpack.c.bf16 %v1183, %v1180
        %v1243 = vpack.c.bf16 %v1191, %v1188
        %v1244 = vpack.c.bf16 %v1199, %v1196
        %v1245 = vpack.c.bf16 %v1207, %v1204
        %v1246 = vpack.c.bf16 %v1215, %v1212
        %v1247 = vpack.c.bf16 %v1223, %v1220
        %v1248 = vpack.c.bf16 %v1231, %v1228
        %v1249 = vpack.c.bf16 %v1239, %v1236
        %v1250 = vld [vmem:[%s4 + $0x2] sm:$0x1]
        %v1251 = vlaneseq
        %v1252 = vshrl.u32 %v1251, 7
        %v1253 = vsub.s32 0, %v1252
        %v1254 = vrot.slane %v1250, %v1253
        %1255 = vmatprep.subr.bf16.mxu0 0
        %1256 = vmatpush1.bf16.msra.mxu0 %v1249
        %1257 = vmatprep.subr.bf16.mxu0 0
        %1258 = vmatpush1.bf16.msra.mxu0 %v1248
        %1259 = vmatprep.subr.bf16.mxu0 0
        %1260 = vmatpush1.bf16.msra.mxu0 %v1247
        %1261 = vmatprep.subr.bf16.mxu0 0
        %1262 = vmatpush1.bf16.msra.mxu0 %v1246
        %1263 = vmatprep.subr.bf16.mxu0 0
        %1264 = vmatpush1.bf16.msra.mxu0 %v1245
        %1265 = vmatprep.subr.bf16.mxu0 0
        %1266 = vmatpush1.bf16.msra.mxu0 %v1244
        %1267 = vmatprep.subr.bf16.mxu0 0
        %1268 = vmatpush1.bf16.msra.mxu0 %v1243
        %1269 = vmatprep.subr.bf16.mxu0 0
        %1270 = vmatpush1.bf16.msra.mxu0 %v1242
        %1271 = vmatprep.subr.bf16.mxu0 0
        %1272 = vmatpush2.bf16.msra.mxu0 0
        %1273 = vmatprep.subr.bf16.mxu0 0
        %1274 = vmatpush2.bf16.msra.mxu0 0
        %1275 = vmatprep.subr.bf16.mxu0 0
        %1276 = vmatpush2.bf16.msra.mxu0 0
        %1277 = vmatprep.subr.bf16.mxu0 0
        %1278 = vmatpush2.bf16.msra.mxu0 0
        %1279 = vmatprep.subr.bf16.mxu0 0
        %1280 = vmatpush2.bf16.msra.mxu0 0
        %1281 = vmatprep.subr.bf16.mxu0 0
        %1282 = vmatpush2.bf16.msra.mxu0 0
        %1283 = vmatprep.subr.bf16.mxu0 0
        %1284 = vmatpush2.bf16.msra.mxu0 0
        %1285 = vmatprep.subr.bf16.mxu0 0
        %1286 = vmatpush2.bf16.msra.mxu0 0
        %1287 = vmatprep.mubr.bf16.mxu0 0
        %1288 = vmatmul.mubr.bf16.gmra.mxu0 %v425
        %v1289 = vpop.f32.mrf.mxu0
        %v1290 = vadd.f32 %v1254, %v1289
        %v1291 = vpop.f32.mrf.mxu0
        %v1292 = vpop.f32.mrf.mxu0
        %v1293 = vadd.f32 %v1254, %v1292
        %v1294 = vpop.f32.mrf.mxu0
        %1295 = vmatprep.mubr.bf16.mxu0 0
        %1296 = vmatmul.mubr.bf16.gmra.mxu0 %v426
        %v1297 = vpop.f32.mrf.mxu0
        %v1298 = vadd.f32 %v1254, %v1297
        %v1299 = vpop.f32.mrf.mxu0
        %v1300 = vpop.f32.mrf.mxu0
        %v1301 = vadd.f32 %v1254, %v1300
        %v1302 = vpop.f32.mrf.mxu0
        %1303 = vmatprep.mubr.bf16.mxu0 0
        %1304 = vmatmul.mubr.bf16.gmra.mxu0 %v427
        %v1305 = vpop.f32.mrf.mxu0
        %v1306 = vadd.f32 %v1254, %v1305
        %v1307 = vpop.f32.mrf.mxu0
        %v1308 = vpop.f32.mrf.mxu0
        %v1309 = vadd.f32 %v1254, %v1308
        %v1310 = vpop.f32.mrf.mxu0
        %1311 = vmatprep.mubr.bf16.mxu0 0
        %1312 = vmatmul.mubr.bf16.gmra.mxu0 %v428
        %v1313 = vpop.f32.mrf.mxu0
        %v1314 = vadd.f32 %v1254, %v1313
        %v1315 = vpop.f32.mrf.mxu0
        %v1316 = vpop.f32.mrf.mxu0
        %v1317 = vadd.f32 %v1254, %v1316
        %v1318 = vpop.f32.mrf.mxu0
        %1319 = vmatprep.mubr.bf16.mxu0 0
        %1320 = vmatmul.mubr.bf16.gmra.mxu0 %v429
        %v1321 = vpop.f32.mrf.mxu0
        %v1322 = vadd.f32 %v1254, %v1321
        %v1323 = vpop.f32.mrf.mxu0
        %v1324 = vpop.f32.mrf.mxu0
        %v1325 = vadd.f32 %v1254, %v1324
        %v1326 = vpop.f32.mrf.mxu0
        %1327 = vmatprep.mubr.bf16.mxu0 0
        %1328 = vmatmul.mubr.bf16.gmra.mxu0 %v430
        %v1329 = vpop.f32.mrf.mxu0
        %v1330 = vadd.f32 %v1254, %v1329
        %v1331 = vpop.f32.mrf.mxu0
        %v1332 = vpop.f32.mrf.mxu0
        %v1333 = vadd.f32 %v1254, %v1332
        %v1334 = vpop.f32.mrf.mxu0
        %1335 = vmatprep.mubr.bf16.mxu0 0
        %1336 = vmatmul.mubr.bf16.gmra.mxu0 %v431
        %v1337 = vpop.f32.mrf.mxu0
        %v1338 = vadd.f32 %v1254, %v1337
        %v1339 = vpop.f32.mrf.mxu0
        %v1340 = vpop.f32.mrf.mxu0
        %v1341 = vadd.f32 %v1254, %v1340
        %v1342 = vpop.f32.mrf.mxu0
        %1343 = vmatprep.mubr.bf16.mxu0 0
        %1344 = vmatmul.mubr.bf16.gmra.mxu0 %v432
        %v1345 = vpop.f32.mrf.mxu0
        %v1346 = vadd.f32 %v1254, %v1345
        %v1347 = vpop.f32.mrf.mxu0
        %v1348 = vpop.f32.mrf.mxu0
        %v1349 = vadd.f32 %v1254, %v1348
        %v1350 = vpop.f32.mrf.mxu0
        %1351 = vdwg.mxu0
        %v1352 = vld [vmem:[%s305] sm:$0xf]
        %v1353 = vpack.c.bf16 %v1293, %v1290
        %v1354 = vpack.c.bf16 %v1301, %v1298
        %v1355 = vpack.c.bf16 %v1309, %v1306
        %v1356 = vpack.c.bf16 %v1317, %v1314
        %v1357 = vpack.c.bf16 %v1325, %v1322
        %v1358 = vpack.c.bf16 %v1333, %v1330
        %v1359 = vpack.c.bf16 %v1341, %v1338
        %v1360 = vpack.c.bf16 %v1349, %v1346
        %1361 = vmatprep.subr.bf16.mxu0 0
        %1362 = vmatpush1.bf16.msra.mxu0 %v1360
        %1363 = vmatprep.subr.bf16.mxu0 0
        %1364 = vmatpush1.bf16.msra.mxu0 %v1359
        %1365 = vmatprep.subr.bf16.mxu0 0
        %1366 = vmatpush1.bf16.msra.mxu0 %v1358
        %1367 = vmatprep.subr.bf16.mxu0 0
        %1368 = vmatpush1.bf16.msra.mxu0 %v1357
        %1369 = vmatprep.subr.bf16.mxu0 0
        %1370 = vmatpush1.bf16.msra.mxu0 %v1356
        %1371 = vmatprep.subr.bf16.mxu0 0
        %1372 = vmatpush1.bf16.msra.mxu0 %v1355
        %1373 = vmatprep.subr.bf16.mxu0 0
        %1374 = vmatpush1.bf16.msra.mxu0 %v1354
        %1375 = vmatprep.subr.bf16.mxu0 0
        %1376 = vmatpush1.bf16.msra.mxu0 %v1353
        %1377 = vmatprep.subr.bf16.mxu0 0
        %1378 = vmatpush2.bf16.msra.mxu0 0
        %1379 = vmatprep.subr.bf16.mxu0 0
        %1380 = vmatpush2.bf16.msra.mxu0 0
        %1381 = vmatprep.subr.bf16.mxu0 0
        %1382 = vmatpush2.bf16.msra.mxu0 0
        %1383 = vmatprep.subr.bf16.mxu0 0
        %1384 = vmatpush2.bf16.msra.mxu0 0
        %1385 = vmatprep.subr.bf16.mxu0 0
        %1386 = vmatpush2.bf16.msra.mxu0 0
        %1387 = vmatprep.subr.bf16.mxu0 0
        %1388 = vmatpush2.bf16.msra.mxu0 0
        %1389 = vmatprep.subr.bf16.mxu0 0
        %1390 = vmatpush2.bf16.msra.mxu0 0
        %1391 = vmatprep.subr.bf16.mxu0 0
        %1392 = vmatpush2.bf16.msra.mxu0 0
        %1393 = vmatprep.mubr.bf16.mxu0 0
        %1394 = vmatmul.mubr.bf16.gmra.mxu0 %v1352
        %v1395 = vpop.f32.mrf.mxu0
        %v1396 = vadd.f32 0.0, %v1395
        %v1397 = vpop.f32.mrf.mxu0
        %v1398 = vpop.f32.mrf.mxu0
        %v1399 = vpop.f32.mrf.mxu0
        %1400 = vdwg.mxu0
        %v1401 = vpack.c.bf16 %v1396, %v1396
        %s1402 = scalar_lea.vmem [#allocation8], 192
        %v1403 = vld [vmem:[%s1402] sm:$0xf]
        %v1404 = vld [vmem:[%s1402 + $0x4] sm:$0xf]
        %v1405 = vld [vmem:[%s1402 + $0x8] sm:$0xf]
        %v1406 = vld [vmem:[%s1402 + $0xc] sm:$0xf]
        %v1407 = vld [vmem:[%s1402 + $0x10] sm:$0xf]
        %v1408 = vld [vmem:[%s1402 + $0x14] sm:$0xf]
        %v1409 = vld [vmem:[%s1402 + $0x18] sm:$0xf]
        %v1410 = vld [vmem:[%s1402 + $0x1c] sm:$0xf]
        %v1411 = vld [vmem:[%s1402 + $0x20] sm:$0xf]
        %v1412 = vld [vmem:[%s1402 + $0x24] sm:$0xf]
        %v1413 = vld [vmem:[%s1402 + $0x28] sm:$0xf]
        %v1414 = vld [vmem:[%s1402 + $0x2c] sm:$0xf]
        %v1415 = vld [vmem:[%s1402 + $0x30] sm:$0xf]
        %v1416 = vld [vmem:[%s1402 + $0x34] sm:$0xf]
        %v1417 = vld [vmem:[%s1402 + $0x38] sm:$0xf]
        %v1418 = vld [vmem:[%s1402 + $0x3c] sm:$0xf]
        %v1419 = vld [vmem:[%s4 + $0x3] sm:$0x1]
        %v1420 = vlaneseq
        %v1421 = vshrl.u32 %v1420, 7
        %v1422 = vsub.s32 0, %v1421
        %v1423 = vrot.slane %v1419, %v1422
        %v1440 = vunpack.c.l.b16 %v1403
        %v1441 = vunpack.c.l.b16 %v1404
        %v1442 = vunpack.c.l.b16 %v1405
        %v1443 = vunpack.c.l.b16 %v1406
        %v1444 = vunpack.c.l.b16 %v1407
        %v1445 = vunpack.c.l.b16 %v1408
        %v1446 = vunpack.c.l.b16 %v1409
        %v1447 = vunpack.c.l.b16 %v1410
        %v1448 = vunpack.c.l.b16 %v1411
        %v1449 = vunpack.c.l.b16 %v1412
        %v1450 = vunpack.c.l.b16 %v1413
        %v1451 = vunpack.c.l.b16 %v1414
        %v1452 = vunpack.c.l.b16 %v1415
        %v1453 = vunpack.c.l.b16 %v1416
        %v1454 = vunpack.c.l.b16 %v1417
        %v1455 = vunpack.c.l.b16 %v1418
        %v1456 = vpack.c.b16 %v1441, %v1440
        %v1457 = vpack.c.b16 %v1443, %v1442
        %v1458 = vpack.c.b16 %v1445, %v1444
        %v1459 = vpack.c.b16 %v1447, %v1446
        %v1460 = vpack.c.b16 %v1449, %v1448
        %v1461 = vpack.c.b16 %v1451, %v1450
        %v1462 = vpack.c.b16 %v1453, %v1452
        %v1463 = vpack.c.b16 %v1455, %v1454
        %1472 = vmatprep.subr.bf16.mxu0 0
        %1473 = vmatpush1.bf16.msra.mxu0 %v1463
        %1474 = vmatprep.subr.bf16.mxu0 0
        %1475 = vmatpush1.bf16.msra.mxu0 %v1462
        %1476 = vmatprep.subr.bf16.mxu0 0
        %1477 = vmatpush1.bf16.msra.mxu0 %v1461
        %1478 = vmatprep.subr.bf16.mxu0 0
        %1479 = vmatpush1.bf16.msra.mxu0 %v1460
        %1480 = vmatprep.subr.bf16.mxu0 0
        %1481 = vmatpush1.bf16.msra.mxu0 %v1459
        %1482 = vmatprep.subr.bf16.mxu0 0
        %1483 = vmatpush1.bf16.msra.mxu0 %v1458
        %1484 = vmatprep.subr.bf16.mxu0 0
        %1485 = vmatpush1.bf16.msra.mxu0 %v1457
        %1486 = vmatprep.subr.bf16.mxu0 0
        %1487 = vmatpush1.bf16.msra.mxu0 %v1456
        %1488 = vmatprep.subr.bf16.mxu0 0
        %1489 = vmatpush2.bf16.msra.mxu0 0
        %1490 = vmatprep.subr.bf16.mxu0 0
        %1491 = vmatpush2.bf16.msra.mxu0 0
        %1492 = vmatprep.subr.bf16.mxu0 0
        %1493 = vmatpush2.bf16.msra.mxu0 0
        %1494 = vmatprep.subr.bf16.mxu0 0
        %1495 = vmatpush2.bf16.msra.mxu0 0
        %1496 = vmatprep.subr.bf16.mxu0 0
        %1497 = vmatpush2.bf16.msra.mxu0 0
        %1498 = vmatprep.subr.bf16.mxu0 0
        %1499 = vmatpush2.bf16.msra.mxu0 0
        %1500 = vmatprep.subr.bf16.mxu0 0
        %1501 = vmatpush2.bf16.msra.mxu0 0
        %1502 = vmatprep.subr.bf16.mxu0 0
        %1503 = vmatpush2.bf16.msra.mxu0 0
        %1504 = vmatprep.mubr.bf16.mxu0 0
        %1505 = vmatmul.mubr.bf16.gmra.mxu0 %v1401
        %v1506 = vpop.f32.mrf.mxu0
        %v1507 = vadd.f32 %v1423, %v1506
        %v1508 = vpop.f32.mrf.mxu0
        %v1509 = vpop.f32.mrf.mxu0
        %v1510 = vpop.f32.mrf.mxu0
        %1511 = vdwg.mxu0
        %v1512 = vmax.f32 %v1507, 0.0
        %v1513 = vpack.c.bf16 %v1512, %v1512
        %s1514 = scalar_lea.vmem [#allocation8], 256
        %v1515 = vld [vmem:[%s1514] sm:$0xf]
        %v1516 = vld [vmem:[%s1514 + $0x4] sm:$0xf]
        %v1517 = vld [vmem:[%s1514 + $0x8] sm:$0xf]
        %v1518 = vld [vmem:[%s1514 + $0xc] sm:$0xf]
        %v1519 = vld [vmem:[%s1514 + $0x10] sm:$0xf]
        %v1520 = vld [vmem:[%s1514 + $0x14] sm:$0xf]
        %v1521 = vld [vmem:[%s1514 + $0x18] sm:$0xf]
        %v1522 = vld [vmem:[%s1514 + $0x1c] sm:$0xf]
        %v1523 = vld [vmem:[%s1514 + $0x20] sm:$0xf]
        %v1524 = vld [vmem:[%s1514 + $0x24] sm:$0xf]
        %v1525 = vld [vmem:[%s1514 + $0x28] sm:$0xf]
        %v1526 = vld [vmem:[%s1514 + $0x2c] sm:$0xf]
        %v1527 = vld [vmem:[%s1514 + $0x30] sm:$0xf]
        %v1528 = vld [vmem:[%s1514 + $0x34] sm:$0xf]
        %v1529 = vld [vmem:[%s1514 + $0x38] sm:$0xf]
        %v1530 = vld [vmem:[%s1514 + $0x3c] sm:$0xf]
        %v1531 = vld [vmem:[%s4 + $0x4] sm:$0x1]
        %v1532 = vlaneseq
        %v1533 = vshrl.u32 %v1532, 7
        %v1534 = vsub.s32 0, %v1533
        %v1535 = vrot.slane %v1531, %v1534
        %v1552 = vunpack.c.l.b16 %v1515
        %v1553 = vunpack.c.l.b16 %v1516
        %v1554 = vunpack.c.l.b16 %v1517
        %v1555 = vunpack.c.l.b16 %v1518
        %v1556 = vunpack.c.l.b16 %v1519
        %v1557 = vunpack.c.l.b16 %v1520
        %v1558 = vunpack.c.l.b16 %v1521
        %v1559 = vunpack.c.l.b16 %v1522
        %v1560 = vunpack.c.l.b16 %v1523
        %v1561 = vunpack.c.l.b16 %v1524
        %v1562 = vunpack.c.l.b16 %v1525
        %v1563 = vunpack.c.l.b16 %v1526
        %v1564 = vunpack.c.l.b16 %v1527
        %v1565 = vunpack.c.l.b16 %v1528
        %v1566 = vunpack.c.l.b16 %v1529
        %v1567 = vunpack.c.l.b16 %v1530
        %v1568 = vpack.c.b16 %v1553, %v1552
        %v1569 = vpack.c.b16 %v1555, %v1554
        %v1570 = vpack.c.b16 %v1557, %v1556
        %v1571 = vpack.c.b16 %v1559, %v1558
        %v1572 = vpack.c.b16 %v1561, %v1560
        %v1573 = vpack.c.b16 %v1563, %v1562
        %v1574 = vpack.c.b16 %v1565, %v1564
        %v1575 = vpack.c.b16 %v1567, %v1566
        %1584 = vmatprep.subr.bf16.mxu0 0
        %1585 = vmatpush1.bf16.msra.mxu0 %v1575
        %1586 = vmatprep.subr.bf16.mxu0 0
        %1587 = vmatpush1.bf16.msra.mxu0 %v1574
        %1588 = vmatprep.subr.bf16.mxu0 0
        %1589 = vmatpush1.bf16.msra.mxu0 %v1573
        %1590 = vmatprep.subr.bf16.mxu0 0
        %1591 = vmatpush1.bf16.msra.mxu0 %v1572
        %1592 = vmatprep.subr.bf16.mxu0 0
        %1593 = vmatpush1.bf16.msra.mxu0 %v1571
        %1594 = vmatprep.subr.bf16.mxu0 0
        %1595 = vmatpush1.bf16.msra.mxu0 %v1570
        %1596 = vmatprep.subr.bf16.mxu0 0
        %1597 = vmatpush1.bf16.msra.mxu0 %v1569
        %1598 = vmatprep.subr.bf16.mxu0 0
        %1599 = vmatpush1.bf16.msra.mxu0 %v1568
        %1600 = vmatprep.subr.bf16.mxu0 0
        %1601 = vmatpush2.bf16.msra.mxu0 0
        %1602 = vmatprep.subr.bf16.mxu0 0
        %1603 = vmatpush2.bf16.msra.mxu0 0
        %1604 = vmatprep.subr.bf16.mxu0 0
        %1605 = vmatpush2.bf16.msra.mxu0 0
        %1606 = vmatprep.subr.bf16.mxu0 0
        %1607 = vmatpush2.bf16.msra.mxu0 0
        %1608 = vmatprep.subr.bf16.mxu0 0
        %1609 = vmatpush2.bf16.msra.mxu0 0
        %1610 = vmatprep.subr.bf16.mxu0 0
        %1611 = vmatpush2.bf16.msra.mxu0 0
        %1612 = vmatprep.subr.bf16.mxu0 0
        %1613 = vmatpush2.bf16.msra.mxu0 0
        %1614 = vmatprep.subr.bf16.mxu0 0
        %1615 = vmatpush2.bf16.msra.mxu0 0
        %1616 = vmatprep.mubr.bf16.mxu0 0
        %1617 = vmatmul.mubr.bf16.gmra.mxu0 %v1513
        %v1618 = vpop.f32.mrf.mxu0
        %v1619 = vadd.f32 %v1535, %v1618
        %v1620 = vpop.f32.mrf.mxu0
        %v1621 = vpop.f32.mrf.mxu0
        %v1622 = vpop.f32.mrf.mxu0
        %1623 = vdwg.mxu0
        %v1624 = vmax.f32 %v1619, 0.0
        %v1625 = vpack.c.bf16 %v1624, %v1624
        %s1626 = scalar_lea.vmem [#allocation8], 320
        %v1627 = vld [vmem:[%s1626] sm:$0xf]
        %v1628 = vld [vmem:[%s1626 + $0x4] sm:$0xf]
        %v1629 = vld [vmem:[%s1626 + $0x8] sm:$0xf]
        %v1630 = vld [vmem:[%s1626 + $0xc] sm:$0xf]
        %v1631 = vld [vmem:[%s1626 + $0x10] sm:$0xf]
        %v1632 = vld [vmem:[%s1626 + $0x14] sm:$0xf]
        %v1633 = vld [vmem:[%s1626 + $0x18] sm:$0xf]
        %v1634 = vld [vmem:[%s1626 + $0x1c] sm:$0xf]
        %v1635 = vld [vmem:[%s1626 + $0x20] sm:$0xf]
        %v1636 = vld [vmem:[%s1626 + $0x24] sm:$0xf]
        %v1637 = vld [vmem:[%s1626 + $0x28] sm:$0xf]
        %v1638 = vld [vmem:[%s1626 + $0x2c] sm:$0xf]
        %v1639 = vld [vmem:[%s1626 + $0x30] sm:$0xf]
        %v1640 = vld [vmem:[%s1626 + $0x34] sm:$0xf]
        %v1641 = vld [vmem:[%s1626 + $0x38] sm:$0xf]
        %v1642 = vld [vmem:[%s1626 + $0x3c] sm:$0xf]
        %v1643 = vld [vmem:[%s4 + $0x5] sm:$0x1]
        %v1644 = vlaneseq
        %v1645 = vshrl.u32 %v1644, 7
        %v1646 = vsub.s32 0, %v1645
        %v1647 = vrot.slane %v1643, %v1646
        %v1664 = vunpack.c.l.b16 %v1627
        %v1665 = vunpack.c.l.b16 %v1628
        %v1666 = vunpack.c.l.b16 %v1629
        %v1667 = vunpack.c.l.b16 %v1630
        %v1668 = vunpack.c.l.b16 %v1631
        %v1669 = vunpack.c.l.b16 %v1632
        %v1670 = vunpack.c.l.b16 %v1633
        %v1671 = vunpack.c.l.b16 %v1634
        %v1672 = vunpack.c.l.b16 %v1635
        %v1673 = vunpack.c.l.b16 %v1636
        %v1674 = vunpack.c.l.b16 %v1637
        %v1675 = vunpack.c.l.b16 %v1638
        %v1676 = vunpack.c.l.b16 %v1639
        %v1677 = vunpack.c.l.b16 %v1640
        %v1678 = vunpack.c.l.b16 %v1641
        %v1679 = vunpack.c.l.b16 %v1642
        %v1680 = vpack.c.b16 %v1665, %v1664
        %v1681 = vpack.c.b16 %v1667, %v1666
        %v1682 = vpack.c.b16 %v1669, %v1668
        %v1683 = vpack.c.b16 %v1671, %v1670
        %v1684 = vpack.c.b16 %v1673, %v1672
        %v1685 = vpack.c.b16 %v1675, %v1674
        %v1686 = vpack.c.b16 %v1677, %v1676
        %v1687 = vpack.c.b16 %v1679, %v1678
        %1696 = vmatprep.subr.bf16.mxu0 0
        %1697 = vmatpush1.bf16.msra.mxu0 %v1687
        %1698 = vmatprep.subr.bf16.mxu0 0
        %1699 = vmatpush1.bf16.msra.mxu0 %v1686
        %1700 = vmatprep.subr.bf16.mxu0 0
        %1701 = vmatpush1.bf16.msra.mxu0 %v1685
        %1702 = vmatprep.subr.bf16.mxu0 0
        %1703 = vmatpush1.bf16.msra.mxu0 %v1684
        %1704 = vmatprep.subr.bf16.mxu0 0
        %1705 = vmatpush1.bf16.msra.mxu0 %v1683
        %1706 = vmatprep.subr.bf16.mxu0 0
        %1707 = vmatpush1.bf16.msra.mxu0 %v1682
        %1708 = vmatprep.subr.bf16.mxu0 0
        %1709 = vmatpush1.bf16.msra.mxu0 %v1681
        %1710 = vmatprep.subr.bf16.mxu0 0
        %1711 = vmatpush1.bf16.msra.mxu0 %v1680
        %1712 = vmatprep.subr.bf16.mxu0 0
        %1713 = vmatpush2.bf16.msra.mxu0 0
        %1714 = vmatprep.subr.bf16.mxu0 0
        %1715 = vmatpush2.bf16.msra.mxu0 0
        %1716 = vmatprep.subr.bf16.mxu0 0
        %1717 = vmatpush2.bf16.msra.mxu0 0
        %1718 = vmatprep.subr.bf16.mxu0 0
        %1719 = vmatpush2.bf16.msra.mxu0 0
        %1720 = vmatprep.subr.bf16.mxu0 0
        %1721 = vmatpush2.bf16.msra.mxu0 0
        %1722 = vmatprep.subr.bf16.mxu0 0
        %1723 = vmatpush2.bf16.msra.mxu0 0
        %1724 = vmatprep.subr.bf16.mxu0 0
        %1725 = vmatpush2.bf16.msra.mxu0 0
        %1726 = vmatprep.subr.bf16.mxu0 0
        %1727 = vmatpush2.bf16.msra.mxu0 0
        %1728 = vmatprep.mubr.bf16.mxu0 0
        %1729 = vmatmul.mubr.bf16.gmra.mxu0 %v1625
        %v1730 = vpop.f32.mrf.mxu0
        %v1731 = vadd.f32 %v1647, %v1730
        %v1732 = vpop.f32.mrf.mxu0
        %v1733 = vpop.f32.mrf.mxu0
        %v1734 = vpop.f32.mrf.mxu0
        %1735 = vdwg.mxu0
        %v1736 = vlaneseq
        %v1737 = vand.u32 %v1736, 127
        %vm1738 = vcmp.lt.s32.totalorder %v1737, 16
        %v1739 = vsel %vm1738, 1, 0
        %v1740 = vcvt.s32.f32 %v1739
        %v1741 = vmul.f32 %v1731, %v1740
        %1742 = vadd.xlane.f32.xlu0 %v1741
        %v1743 = vpop.xlane.xlu0 %1742
        %v1744 = vmul.f32 %v1743, 0.0625
        %v1745 = vsub.f32 %v1741, %v1744
        %v1746 = vmul.f32 %v1745, %v1740
        %v1747 = vmul.f32 %v1746, %v1746
        %1748 = vadd.xlane.f32.xlu0 %v1747
        %v1749 = vpop.xlane.xlu0 %1748
        %v1750 = vmul.f32 %v1749, 0.0625
        %v1751 = vadd.f32 %v1750, 1e-05
        %v1752 = vrsqrt.pop %v1751
        %v1753 = vmul.f32 %v1746, %v1752
        %v1754 = vld [vmem:[%s4 + $0x6] sm:$0x1]
        %v1755 = vlaneseq
        %v1756 = vshrl.u32 %v1755, 7
        %v1757 = vsub.s32 0, %v1756
        %v1758 = vrot.slane %v1754, %v1757
        %v1759 = vmul.f32 %v1753, %v1758
        %v1760 = vld [vmem:[%s4 + $0x7] sm:$0x1]
        %v1761 = vlaneseq
        %v1762 = vshrl.u32 %v1761, 7
        %v1763 = vsub.s32 0, %v1762
        %v1764 = vrot.slane %v1760, %v1763
        %v1765 = vadd.f32 %v1759, %v1764
        %s1766 = sld [smem:[#allocation2]]
        %v1767 = vstv %s1766
        %v1768 = vmul.f32 %v1767, 1.442695
        %v1769 = vpow.pop %v1768
        %s1770 = vtos %v1769
        %v1771 = vstv %s1770
        %v1772 = vmul.f32 %v1765, %v1771
        %1773 = vst [vmem:[%s359] sm:$0xff] %v1772
        %p1774 = scmp.lt.s32.totalorder %s25, 3
        %s1775 = scalar_select %p1774, %s25, 3
        %s1776 = smul.addr %s1775, 8
        %s1777 = scalar_lea.vmem %s6, %s1776
        // Predicated region
        $region61: #{graph_encoder_pallas_batched.1} parent=43 // pred_check
          %p1778 = pneg %p184
        $region62: #{graph_encoder_pallas_batched.1} parent=43 // pred_check_branch
          %1780 = sbr.rel (%p1778) target = $region64
        $region63: #{graph_encoder_pallas_batched.1} parent=43 // pred_region
          _
        $region64: #{graph_encoder_pallas_batched.1} parent=43 // pred_fallthru
          _
      $region44: #{graph_encoder_pallas_batched.1} parent=5 // pred_fallthru
        _
      %p1781 = scmp.le.s32.totalorder 2, %s20
      // Predicated region
      $region65: #{graph_encoder_pallas_batched.1} parent=5 // pred_check
        %p1782 = pneg %p1781
      $region66: #{graph_encoder_pallas_batched.1} parent=5 // pred_check_branch
        %1784 = sbr.rel (%p1782) target = $region68
      $region67: #{graph_encoder_pallas_batched.1} parent=5 // pred_region
        %s1785 = ssub.s32 %s20, 2
        // Predicated region
        $region69: #{graph_encoder_pallas_batched.1} parent=67 // pred_check
          %p1786 = pneg %p190
        $region70: #{graph_encoder_pallas_batched.1} parent=67 // pred_check_branch
          %1788 = sbr.rel (%p1786) target = $region72
        $region71: #{graph_encoder_pallas_batched.1} parent=67 // pred_region
          %p1789 = scmp.lt.s32.totalorder %s26, 3
          %s1790 = scalar_select %p1789, %s26, 3
          %s1791 = smul.addr %s1790, 8
          %s1792 = scalar_lea.vmem %s6, %s1791
        $region72: #{graph_encoder_pallas_batched.1} parent=67 // pred_fallthru
          _
      $region68: #{graph_encoder_pallas_batched.1} parent=5 // pred_fallthru
        _
    $region6: #{graph_encoder_pallas_batched.1} parent=1 // loop_footer
      %s24 = sadd.s32 1, %s20
    $region7: #{graph_encoder_pallas_batched.1} parent=1 // loop_footer_branch
      %19 = sbr.rel target = $region3
    $region8: #{graph_encoder_pallas_batched.1} parent=1 // loop_exit
      _
    %1793 = vsyncpa [#allocation4], 1
    %s1794 = scalar_lea.sflag [#allocation4], 1
    %1795 = vsyncpa %s1794, 1
    %1796 = vsyncpa [#allocation6], 1
    %s1797 = scalar_lea.sflag [#allocation6], 1
    %1798 = vsyncpa %s1797, 1
    %1799 = vsyncpa [#allocation9], 1

</llo_original>
